<compile_context>
chip_gen: v7x
topology: tpu7x:2x2x1
jax: 0.10.0
libtpu: 0.0.40
codegen_flags: <defaults>
</compile_context>

<pallas_src>
import math
import functools

import jax
import jax.numpy as jnp
from jax.experimental import pallas as pl
from jax.experimental.pallas import tpu as pltpu


_NEG_INF = -1e30          # finite mask value (avoids -inf - -inf NaNs in online softmax)
_VMEM_LIMIT = 64 * 1024 * 1024


# ----------------------------- in-kernel helpers -----------------------------

def _layernorm(x, g, b, eps=1e-5):
    mu = jnp.mean(x, axis=-1, keepdims=True)
    var = jnp.mean((x - mu) ** 2, axis=-1, keepdims=True)
    return (x - mu) * jax.lax.rsqrt(var + eps) * g + b


def _gelu_tanh(x):
    # nn.GELU(approximate='tanh'), f32 math
    c = math.sqrt(2.0 / math.pi)
    return 0.5 * x * (1.0 + jnp.tanh(c * (x + 0.044715 * x * x * x)))


# ----------------------------- kernel 1: LN1 + QKV projection -----------------------------

def _ln_qkv_kernel(x_ref, g_ref, b_ref, w_ref, bias_ref, q_ref, k_ref, v_ref):
    x = x_ref[...]                                                # (TM, C) f32
    C = x.shape[-1]
    h = _layernorm(x, g_ref[0], b_ref[0]).astype(jnp.bfloat16)
    # 1/sqrt(hd) is pre-folded into the Q columns of w/b at param-prep time.
    qkv = jnp.dot(h, w_ref[...], preferred_element_type=jnp.float32) + bias_ref[0]
    q_ref[...] = qkv[:, 0 * C:1 * C].astype(q_ref.dtype)
    k_ref[...] = qkv[:, 1 * C:2 * C].astype(k_ref.dtype)
    v_ref[...] = qkv[:, 2 * C:3 * C].astype(v_ref.dtype)


# ----------------------------- kernel 2: causal flash attention -----------------------------

def _flash_attn_kernel(n_head, tq, tk,
                       q_ref, k_ref, v_ref, o_ref,
                       m_ref, l_ref, acc_ref):
    qi = pl.program_id(1)
    ki = pl.program_id(2)
    nk = pl.num_programs(2)
    C = q_ref.shape[-1]
    hd = C // n_head

    q_first = qi * tq
    q_last = q_first + tq - 1
    k_first = ki * tk
    k_last = k_first + tk - 1

    @pl.when(ki == 0)
    def _init():
        m_ref[...] = jnp.full(m_ref.shape, _NEG_INF, jnp.float32)
        l_ref[...] = jnp.zeros(l_ref.shape, jnp.float32)
        acc_ref[...] = jnp.zeros(acc_ref.shape, jnp.float32)

    def attend(masked):
        q = q_ref[0]                                              # (TQ, C) bf16
        k = k_ref[0]                                              # (TK, C) bf16
        v = v_ref[0]                                              # (TK, C) bf16
        if masked:
            rows = q_first + jax.lax.broadcasted_iota(jnp.int32, (tq, tk), 0)
            cols = k_first + jax.lax.broadcasted_iota(jnp.int32, (tq, tk), 1)
            causal = cols <= rows
        for h in range(n_head):                                   # static lane slices, no transposes
            sl = slice(h * hd, (h + 1) * hd)
            # scores: contract head dim directly (q @ k^T without relayout)
            s = jax.lax.dot_general(q[:, sl], k[:, sl], (((1,), (1,)), ((), ())),
                                    preferred_element_type=jnp.float32)   # (TQ, TK) f32
            if masked:
                s = jnp.where(causal, s, _NEG_INF)
            m_prev = m_ref[h]                                     # (TQ, 1)
            m_new = jnp.maximum(m_prev, jnp.max(s, axis=-1, keepdims=True))
            alpha = jnp.exp(m_prev - m_new)
            # TODO(synk): on v6e/v7x an exp in bf16 would roughly double EUP
            # throughput; kept f32 so the same kernel is correct on v5e.
            p = jnp.exp(s - m_new)
            l_ref[h] = alpha * l_ref[h] + jnp.sum(p, axis=-1, keepdims=True)
            acc_ref[:, sl] = alpha * acc_ref[:, sl] + jnp.dot(
                p.astype(jnp.bfloat16), v[:, sl], preferred_element_type=jnp.float32)
            m_ref[h] = m_new

    # Interior blocks fully below the causal diagonal: no mask work at all.
    @pl.when(k_last <= q_first)
    def _interior():
        attend(masked=False)

    # Blocks crossing the diagonal: build and apply the causal mask.
    @pl.when(jnp.logical_and(k_first <= q_last, k_last > q_first))
    def _diag():
        attend(masked=True)

    # (Blocks with k_first > q_last are skipped entirely; their K/V DMAs are
    # elided by the clamped index_map in the wrapper.)

    @pl.when(ki == nk - 1)
    def _finalize():
        # Normalize per-head inside the lane-dense scratch, then do ONE
        # full-width (TQ, C) unmasked store to the pipelined output.
        for h in range(n_head):
            sl = slice(h * hd, (h + 1) * hd)
            acc_ref[:, sl] = acc_ref[:, sl] * pl.reciprocal(l_ref[h], approx=True)
        o_ref[0] = acc_ref[...].astype(o_ref.dtype)


# ----------------------------- kernel 3: attn proj + residual + LN2 + MLP + residual ----------
# Grid = (M//tm, 4C//tf): the FFN hidden dim is tiled so only one (C, tf) chunk
# of c_fc and one (tf, C) chunk of mlp.c_proj are resident per step.

def _proj_mlp_kernel(x_ref, y_ref,
                     wpr_ref, bpr_ref,
                     g2_ref, b2_ref,
                     wfc_ref, bfc_ref,
                     wp2_ref, bp2_ref,
                     out_ref,
                     x1_ref, h_ref, acc_ref):
    f = pl.program_id(1)
    nf = pl.num_programs(1)

    @pl.when(f == 0)
    def _prologue():
        attn = jnp.dot(y_ref[...], wpr_ref[...],
                       preferred_element_type=jnp.float32) + bpr_ref[0]
        x1 = x_ref[...] + attn                                    # (TM, C) f32 residual
        x1_ref[...] = x1
        h_ref[...] = _layernorm(x1, g2_ref[0], b2_ref[0]).astype(jnp.bfloat16)
        acc_ref[...] = jnp.zeros_like(acc_ref)

    # One FFN hidden-dim chunk: fc-chunk -> GELU -> accumulate with matching
    # mlp.c_proj row-chunk.
    ff = jnp.dot(h_ref[...], wfc_ref[...],
                 preferred_element_type=jnp.float32) + bfc_ref[0]
    ff = _gelu_tanh(ff).astype(jnp.bfloat16)
    acc_ref[...] += jnp.dot(ff, wp2_ref[...], preferred_element_type=jnp.float32)

    @pl.when(f == nf - 1)
    def _epilogue():
        out_ref[...] = x1_ref[...] + acc_ref[...] + bp2_ref[0]


# ----------------------------- wrapper -----------------------------

def _pick_tile(total, preferred):
    for cand in (preferred, 512, 256, 128, 64, 32, 16, 8):
        if cand <= total and total % cand == 0:
            return cand
    return total


def block_forward(x, p, n_head, *, tm=512, tq=128, tk=256, tf=512):
    """x: (B, T, C) f32 -> (B, T, C) f32.  p: dict of Block params (bf16 weights,
    Q-scale pre-folded into w_qkv/b_qkv)."""
    B, T, C = x.shape
    assert C % n_head == 0
    M = B * T
    F = 4 * C
    tm = _pick_tile(M, tm)        # M tile for the linear kernels (B folded into M)
    tq = _pick_tile(T, tq)        # query tile
    tk = _pick_tile(T, tk)        # kv tile
    tf = _pick_tile(F, tf)        # FFN hidden-dim tile

    x2d = x.reshape(M, C)

    # ---- LN1 + QKV projection (bf16 weights, f32 accumulation) ----
    q2d, k2d, v2d = pl.pallas_call(
        _ln_qkv_kernel,
        out_shape=tuple(jax.ShapeDtypeStruct((M, C), jnp.bfloat16) for _ in range(3)),
        grid=(M // tm,),
        in_specs=[
            pl.BlockSpec((tm, C), lambda i: (i, 0)),          # x
            pl.BlockSpec((1, C), lambda i: (0, 0)),           # ln_1 gamma
            pl.BlockSpec((1, C), lambda i: (0, 0)),           # ln_1 beta
            pl.BlockSpec((C, 3 * C), lambda i: (0, 0)),       # c_attn W (bf16, Q-scaled)
            pl.BlockSpec((1, 3 * C), lambda i: (0, 0)),       # c_attn b (Q-scaled)
        ],
        out_specs=tuple(pl.BlockSpec((tm, C), lambda i: (i, 0)) for _ in range(3)),
        compiler_params=pltpu.CompilerParams(
            dimension_semantics=("parallel",),
            vmem_limit_bytes=_VMEM_LIMIT),
    )(x2d, p["ln1_g"], p["ln1_b"], p["w_qkv"], p["b_qkv"])

    q = q2d.reshape(B, T, C)
    k = k2d.reshape(B, T, C)
    v = v2d.reshape(B, T, C)

    # K/V index maps clamp the KV block index to the last causally-needed block
    # for this query tile, so fully-masked blocks are never DMA'd (the in-kernel
    # pl.when gate still skips their compute — keep both together).
    def _kv_index(b, i, j):
        last_needed = (i * tq + tq - 1) // tk
        return (b, jnp.minimum(j, last_needed), 0)

    # ---- causal flash attention (online softmax, KV tiling, lane-dense acc) ----
    y = pl.pallas_call(
        functools.partial(_flash_attn_kernel, n_head, tq, tk),
        out_shape=jax.ShapeDtypeStruct((B, T, C), jnp.bfloat16),
        grid=(B, T // tq, T // tk),
        in_specs=[
            pl.BlockSpec((1, tq, C), lambda b, i, j: (b, i, 0)),
            pl.BlockSpec((1, tk, C), _kv_index),
            pl.BlockSpec((1, tk, C), _kv_index),
        ],
        out_specs=pl.BlockSpec((1, tq, C), lambda b, i, j: (b, i, 0)),
        scratch_shapes=[
            pltpu.VMEM((n_head, tq, 1), jnp.float32),   # m
            pltpu.VMEM((n_head, tq, 1), jnp.float32),   # l
            pltpu.VMEM((tq, C), jnp.float32),           # acc (lane-dense)
        ],
        compiler_params=pltpu.CompilerParams(
            dimension_semantics=("parallel", "parallel", "arbitrary"),
            vmem_limit_bytes=_VMEM_LIMIT),
    )(q, k, v)

    # ---- attn output proj + residual + LN2 + MLP (GELU tanh, FFN tiled) + residual ----
    # TODO(synk): constant-index weight blocks could be single-buffered
    # (pipeline_mode=pl.Buffered(1)) to shave more VMEM if needed.
    out2d = pl.pallas_call(
        _proj_mlp_kernel,
        out_shape=jax.ShapeDtypeStruct((M, C), jnp.float32),
        grid=(M // tm, F // tf),
        in_specs=[
            pl.BlockSpec((tm, C), lambda i, f: (i, 0)),       # x (residual)
            pl.BlockSpec((tm, C), lambda i, f: (i, 0)),       # attention heads output
            pl.BlockSpec((C, C), lambda i, f: (0, 0)),        # attn c_proj W (bf16)
            pl.BlockSpec((1, C), lambda i, f: (0, 0)),        # attn c_proj b
            pl.BlockSpec((1, C), lambda i, f: (0, 0)),        # ln_2 gamma
            pl.BlockSpec((1, C), lambda i, f: (0, 0)),        # ln_2 beta
            pl.BlockSpec((C, tf), lambda i, f: (0, f)),       # c_fc W chunk (bf16)
            pl.BlockSpec((1, tf), lambda i, f: (0, f)),       # c_fc b chunk
            pl.BlockSpec((tf, C), lambda i, f: (f, 0)),       # mlp c_proj W chunk (bf16)
            pl.BlockSpec((1, C), lambda i, f: (0, 0)),        # mlp c_proj b
        ],
        out_specs=pl.BlockSpec((tm, C), lambda i, f: (i, 0)),
        scratch_shapes=[
            pltpu.VMEM((tm, C), jnp.float32),     # x1 (post-attn residual)
            pltpu.VMEM((tm, C), jnp.bfloat16),    # h  = ln_2(x1)
            pltpu.VMEM((tm, C), jnp.float32),     # MLP output accumulator
        ],
        compiler_params=pltpu.CompilerParams(
            dimension_semantics=("parallel", "arbitrary"),
            vmem_limit_bytes=_VMEM_LIMIT),
    )(x2d, y.reshape(M, C),
      p["w_proj"], p["b_proj"], p["ln2_g"], p["ln2_b"],
      p["w_fc"], p["b_fc"], p["w_proj2"], p["b_proj2"])

    return out2d.reshape(B, T, C)


# ----------------------------- parameter init -----------------------------

def init_block_params(key, n_embd, n_head, n_layer=1):
    C = n_embd
    hd = C // n_head
    q_scale = 1.0 / math.sqrt(hd)
    std = 0.02
    std_proj = std * (2 * n_layer) ** -0.5      # NANOGPT_SCALE_INIT for c_proj layers
    k = jax.random.split(key, 4)
    normal = lambda kk, shape, s: (s * jax.random.normal(kk, shape, jnp.float32))

    # weights stored (in, out); transpose when importing PyTorch (out, in) checkpoints.
    # The attention 1/sqrt(head_dim) scale is folded into the Q projection
    # columns (mathematically identical to F.scaled_dot_product_attention).
    w_qkv = normal(k[0], (C, 3 * C), std)
    b_qkv = jnp.zeros((1, 3 * C), jnp.float32)
    w_qkv = w_qkv.at[:, :C].multiply(q_scale)
    b_qkv = b_qkv.at[:, :C].multiply(q_scale)

    return {
        "ln1_g": jnp.ones((1, C), jnp.float32),
        "ln1_b": jnp.zeros((1, C), jnp.float32),
        "w_qkv": w_qkv.astype(jnp.bfloat16),
        "b_qkv": b_qkv,
        "w_proj": normal(k[1], (C, C), std_proj).astype(jnp.bfloat16),
        "b_proj": jnp.zeros((1, C), jnp.float32),
        "ln2_g": jnp.ones((1, C), jnp.float32),
        "ln2_b": jnp.zeros((1, C), jnp.float32),
        "w_fc": normal(k[2], (C, 4 * C), std).astype(jnp.bfloat16),
        "b_fc": jnp.zeros((1, 4 * C), jnp.float32),
        "w_proj2": normal(k[3], (4 * C, C), std_proj).astype(jnp.bfloat16),
        "b_proj2": jnp.zeros((1, C), jnp.float32),
    }


# ----------------------------- pure-JAX reference (same precision policy) -----------------------------

def _block_ref(x, p, n_head):
    B, T, C = x.shape
    hd = C // n_head
    bf16, f32 = jnp.bfloat16, jnp.float32

    def ln(v, g, b):
        mu = jnp.mean(v, -1, keepdims=True)
        var = jnp.mean((v - mu) ** 2, -1, keepdims=True)
        return (v - mu) * jax.lax.rsqrt(var + 1e-5) * g + b

    h = ln(x, p["ln1_g"][0], p["ln1_b"][0]).astype(bf16)
    qkv = jnp.einsum("btc,cd->btd", h, p["w_qkv"], preferred_element_type=f32) + p["b_qkv"][0]
    # Q-scale already folded into w_qkv/b_qkv (== SDPA's 1/sqrt(hd) scaling).
    q = qkv[..., 0 * C:1 * C].astype(bf16).astype(f32)
    k = qkv[..., 1 * C:2 * C].astype(bf16).astype(f32)
    v = qkv[..., 2 * C:3 * C].astype(bf16).astype(f32)
    q = q.reshape(B, T, n_head, hd).transpose(0, 2, 1, 3)
    k = k.reshape(B, T, n_head, hd).transpose(0, 2, 1, 3)
    v = v.reshape(B, T, n_head, hd).transpose(0, 2, 1, 3)
    s = jnp.einsum("bhtd,bhsd->bhts", q, k)
    mask = jnp.tril(jnp.ones((T, T), bool))
    s = jnp.where(mask, s, _NEG_INF)
    pr = jax.nn.softmax(s, axis=-1)
    y = jnp.einsum("bhts,bhsd->bhtd", pr, v)
    y = y.transpose(0, 2, 1, 3).reshape(B, T, C).astype(bf16)
    attn = jnp.einsum("btc,cd->btd", y, p["w_proj"], preferred_element_type=f32) + p["b_proj"][0]
    x1 = x + attn
    h2 = ln(x1, p["ln2_g"][0], p["ln2_b"][0]).astype(bf16)
    ff = jnp.einsum("btc,cd->btd", h2, p["w_fc"], preferred_element_type=f32) + p["b_fc"][0]
    ff = _gelu_tanh(ff).astype(bf16)
    return x1 + jnp.einsum("btc,cd->btd", ff, p["w_proj2"], preferred_element_type=f32) + p["b_proj2"][0]


# ----------------------------- main -----------------------------

if __name__ == "__main__":
    B, T, C, n_head = 2, 256, 128, 4

    key = jax.random.PRNGKey(0)
    kx, kp = jax.random.split(key)
    params = init_block_params(kp, C, n_head, n_layer=1)
    x = jax.random.normal(kx, (B, T, C), dtype=jnp.float32)

    # tq=tk=128 exercises both the unmasked-interior and masked-diagonal KV
    # paths plus the DMA-clamped skipped blocks; tf=256 exercises the FFN
    # hidden-dim accumulation loop (nf=2). All grid parallel extents are >=2
    # so both v7x TensorCores get work.
    out = block_forward(x, params, n_head, tm=256, tq=128, tk=128, tf=256)
    out = jax.block_until_ready(out)

    assert out.shape == (B, T, C)
    assert bool(jnp.all(jnp.isfinite(out)))

    ref = _block_ref(x, params, n_head)
    assert bool(jnp.allclose(out, ref, atol=2e-2, rtol=2e-2)), \
        float(jnp.max(jnp.abs(out - ref)))

    print("KERNEL_OK")
</pallas_src>

<mosaic_0001>
module attributes {stable_mosaic.version = 11 : i64} {
  func.func @_ln_qkv_kernel(%arg0: i32, %arg1: memref<256x128xf32, #tpu.memory_space<vmem>>, %arg2: memref<1x128xf32, #tpu.memory_space<vmem>>, %arg3: memref<1x128xf32, #tpu.memory_space<vmem>>, %arg4: memref<128x384xbf16, #tpu.memory_space<vmem>>, %arg5: memref<1x384xf32, #tpu.memory_space<vmem>>, %arg6: memref<256x128xbf16, #tpu.memory_space<vmem>>, %arg7: memref<256x128xbf16, #tpu.memory_space<vmem>>, %arg8: memref<256x128xbf16, #tpu.memory_space<vmem>>) attributes {dimension_semantics = [#tpu.dimension_semantics<parallel>], iteration_bounds = array<i64: 2>, scalar_prefetch = 0 : i64, scratch_operands = 0 : i64, tpu.core_type = #tpu.core_type<tc>, window_params = [{transform_indices = @transform_0, window_bounds = array<i64: 256, 128>}, {pipeline_mode = #tpu.pipeline_mode<synchronous>, transform_indices = @transform_1, window_bounds = array<i64: 1, 128>}, {pipeline_mode = #tpu.pipeline_mode<synchronous>, transform_indices = @transform_2, window_bounds = array<i64: 1, 128>}, {pipeline_mode = #tpu.pipeline_mode<synchronous>, transform_indices = @transform_3, window_bounds = array<i64: 128, 384>}, {pipeline_mode = #tpu.pipeline_mode<synchronous>, transform_indices = @transform_4, window_bounds = array<i64: 1, 384>}, {transform_indices = @transform_5, window_bounds = array<i64: 256, 128>}, {transform_indices = @transform_6, window_bounds = array<i64: 256, 128>}, {transform_indices = @transform_7, window_bounds = array<i64: 256, 128>}]} {
    %c0 = arith.constant 0 : index
    %c0_0 = arith.constant 0 : index
    %0 = vector.load %arg1[%c0, %c0_0] : memref<256x128xf32, #tpu.memory_space<vmem>>, vector<256x128xf32>
    %c0_1 = arith.constant 0 : index
    %c0_2 = arith.constant 0 : index
    %1 = vector.load %arg2[%c0_1, %c0_2] : memref<1x128xf32, #tpu.memory_space<vmem>>, vector<1x128xf32>
    %2 = vector.shape_cast %1 : vector<1x128xf32> to vector<128xf32>
    %c0_3 = arith.constant 0 : index
    %c0_4 = arith.constant 0 : index
    %3 = vector.load %arg3[%c0_3, %c0_4] : memref<1x128xf32, #tpu.memory_space<vmem>>, vector<1x128xf32>
    %4 = vector.shape_cast %3 : vector<1x128xf32> to vector<128xf32>
    %cst = arith.constant dense<0.000000e+00> : vector<256xf32>
    %5 = vector.multi_reduction <add>, %0, %cst [1] : vector<256x128xf32> to vector<256xf32>
    %6 = vector.shape_cast %5 : vector<256xf32> to vector<256x1xf32>
    %cst_5 = arith.constant 1.280000e+02 : f32
    %7 = vector.broadcast %cst_5 : f32 to vector<256x1xf32>
    %8 = arith.divf %6, %7 : vector<256x1xf32>
    %9 = vector.broadcast %8 : vector<256x1xf32> to vector<256x128xf32>
    %10 = arith.subf %0, %9 : vector<256x128xf32>
    %11 = arith.mulf %10, %10 : vector<256x128xf32>
    %cst_6 = arith.constant dense<0.000000e+00> : vector<256xf32>
    %12 = vector.multi_reduction <add>, %11, %cst_6 [1] : vector<256x128xf32> to vector<256xf32>
    %13 = vector.shape_cast %12 : vector<256xf32> to vector<256x1xf32>
    %cst_7 = arith.constant 1.280000e+02 : f32
    %14 = vector.broadcast %cst_7 : f32 to vector<256x1xf32>
    %15 = arith.divf %13, %14 : vector<256x1xf32>
    %16 = vector.broadcast %8 : vector<256x1xf32> to vector<256x128xf32>
    %17 = arith.subf %0, %16 : vector<256x128xf32>
    %cst_8 = arith.constant 9.99999974E-6 : f32
    %18 = vector.broadcast %cst_8 : f32 to vector<256x1xf32>
    %19 = arith.addf %15, %18 : vector<256x1xf32>
    %20 = math.rsqrt %19 : vector<256x1xf32>
    %21 = vector.broadcast %20 : vector<256x1xf32> to vector<256x128xf32>
    %22 = arith.mulf %17, %21 : vector<256x128xf32>
    %23 = vector.shape_cast %2 : vector<128xf32> to vector<1x128xf32>
    %24 = vector.broadcast %23 : vector<1x128xf32> to vector<256x128xf32>
    %25 = arith.mulf %22, %24 : vector<256x128xf32>
    %26 = vector.shape_cast %4 : vector<128xf32> to vector<1x128xf32>
    %27 = vector.broadcast %26 : vector<1x128xf32> to vector<256x128xf32>
    %28 = arith.addf %25, %27 : vector<256x128xf32>
    %29 = arith.truncf %28 : vector<256x128xf32> to vector<256x128xbf16>
    %c0_9 = arith.constant 0 : index
    %c0_10 = arith.constant 0 : index
    %30 = vector.load %arg4[%c0_9, %c0_10] : memref<128x384xbf16, #tpu.memory_space<vmem>>, vector<128x384xbf16>
    %cst_11 = arith.constant dense<0.000000e+00> : vector<256x384xf32>
    %31 = tpu.matmul %29, %30, %cst_11 {dimension_numbers = #tpu.dot_dimension_numbers<[1], [0], [0], [1], [0, 0, 1, 1], [], []>} : vector<256x128xbf16>, vector<128x384xbf16>, vector<256x384xf32> -> vector<256x384xf32>
    %c0_12 = arith.constant 0 : index
    %c0_13 = arith.constant 0 : index
    %32 = vector.load %arg5[%c0_12, %c0_13] : memref<1x384xf32, #tpu.memory_space<vmem>>, vector<1x384xf32>
    %33 = vector.shape_cast %32 : vector<1x384xf32> to vector<384xf32>
    %34 = vector.shape_cast %33 : vector<384xf32> to vector<1x384xf32>
    %35 = vector.broadcast %34 : vector<1x384xf32> to vector<256x384xf32>
    %36 = arith.addf %31, %35 : vector<256x384xf32>
    %37 = vector.extract_strided_slice %36 {offsets = [0, 0], sizes = [256, 128], strides = [1, 1]} : vector<256x384xf32> to vector<256x128xf32>
    %38 = arith.truncf %37 : vector<256x128xf32> to vector<256x128xbf16>
    %c0_14 = arith.constant 0 : index
    %c0_15 = arith.constant 0 : index
    %39 = vector.load %arg6[%c0_14, %c0_15] : memref<256x128xbf16, #tpu.memory_space<vmem>>, vector<256x128xbf16>
    tpu.vector_store %arg6[%c0_14, %c0_15], %38 {strides = array<i32>} : memref<256x128xbf16, #tpu.memory_space<vmem>>, vector<256x128xbf16>,
    %40 = vector.extract_strided_slice %36 {offsets = [0, 128], sizes = [256, 128], strides = [1, 1]} : vector<256x384xf32> to vector<256x128xf32>
    %41 = arith.truncf %40 : vector<256x128xf32> to vector<256x128xbf16>
    %c0_16 = arith.constant 0 : index
    %c0_17 = arith.constant 0 : index
    %42 = vector.load %arg7[%c0_16, %c0_17] : memref<256x128xbf16, #tpu.memory_space<vmem>>, vector<256x128xbf16>
    tpu.vector_store %arg7[%c0_16, %c0_17], %41 {strides = array<i32>} : memref<256x128xbf16, #tpu.memory_space<vmem>>, vector<256x128xbf16>,
    %43 = vector.extract_strided_slice %36 {offsets = [0, 256], sizes = [256, 128], strides = [1, 1]} : vector<256x384xf32> to vector<256x128xf32>
    %44 = arith.truncf %43 : vector<256x128xf32> to vector<256x128xbf16>
    %c0_18 = arith.constant 0 : index
    %c0_19 = arith.constant 0 : index
    %45 = vector.load %arg8[%c0_18, %c0_19] : memref<256x128xbf16, #tpu.memory_space<vmem>>, vector<256x128xbf16>
    tpu.vector_store %arg8[%c0_18, %c0_19], %44 {strides = array<i32>} : memref<256x128xbf16, #tpu.memory_space<vmem>>, vector<256x128xbf16>,
    return
  }
  func.func @transform_0(%arg0: i32) -> (i32, i32) {
    %c0_i32 = arith.constant 0 : i32
    %c0_i32_0 = arith.constant 0 : i32
    return %arg0, %c0_i32 : i32, i32
  }
  func.func @transform_1(%arg0: i32) -> (i32, i32) {
    %c0_i32 = arith.constant 0 : i32
    %c0_i32_0 = arith.constant 0 : i32
    %c0_i32_1 = arith.constant 0 : i32
    return %c0_i32, %c0_i32_0 : i32, i32
  }
  func.func @transform_2(%arg0: i32) -> (i32, i32) {
    %c0_i32 = arith.constant 0 : i32
    %c0_i32_0 = arith.constant 0 : i32
    %c0_i32_1 = arith.constant 0 : i32
    return %c0_i32, %c0_i32_0 : i32, i32
  }
  func.func @transform_3(%arg0: i32) -> (i32, i32) {
    %c0_i32 = arith.constant 0 : i32
    %c0_i32_0 = arith.constant 0 : i32
    %c0_i32_1 = arith.constant 0 : i32
    return %c0_i32, %c0_i32_0 : i32, i32
  }
  func.func @transform_4(%arg0: i32) -> (i32, i32) {
    %c0_i32 = arith.constant 0 : i32
    %c0_i32_0 = arith.constant 0 : i32
    %c0_i32_1 = arith.constant 0 : i32
    return %c0_i32, %c0_i32_0 : i32, i32
  }
  func.func @transform_5(%arg0: i32) -> (i32, i32) {
    %c0_i32 = arith.constant 0 : i32
    %c0_i32_0 = arith.constant 0 : i32
    return %arg0, %c0_i32 : i32, i32
  }
  func.func @transform_6(%arg0: i32) -> (i32, i32) {
    %c0_i32 = arith.constant 0 : i32
    %c0_i32_0 = arith.constant 0 : i32
    return %arg0, %c0_i32 : i32, i32
  }
  func.func @transform_7(%arg0: i32) -> (i32, i32) {
    %c0_i32 = arith.constant 0 : i32
    %c0_i32_0 = arith.constant 0 : i32
    return %arg0, %c0_i32 : i32, i32
  }
}

</mosaic_0001>

<llo_original>
// kernel: tpu_custom_call.1
$region0: #{tpu_custom_call.1}
  #allocation0 [shape = 'u32[]', space=smem, size = 0x4, offset = 0x4, fixed_abs, tag = 'smem constant byte address 0x4 - core index']
  #allocation1 [shape = 'u32[144,128]{1,0:T(1,128)}', space=vmem, size = 0x12000, scoped, tag = 'internal scratch']
  %s0 = inlined_call_operand.hbm [shape: f32[512,128], index: 0, kind: input, shape index: {}]
  %s1 = inlined_call_operand.hbm [shape: f32[1,128], index: 1, kind: input, shape index: {}]
  %s2 = inlined_call_operand.hbm [shape: f32[1,128], index: 2, kind: input, shape index: {}]
  %s3 = inlined_call_operand.hbm [shape: bf16[128,384], index: 3, kind: input, shape index: {}]
  %s4 = inlined_call_operand.hbm [shape: f32[1,384], index: 4, kind: input, shape index: {}]
  %s5 = inlined_call_operand.hbm [shape: bf16[512,128], index: 5, kind: output, shape index: {0}]
  %s6 = inlined_call_operand.hbm [shape: bf16[512,128], index: 6, kind: output, shape index: {1}]
  %s7 = inlined_call_operand.hbm [shape: bf16[512,128], index: 7, kind: output, shape index: {2}]
  %8 = xla_tuple %s5, %s6, %s7
  %s9 = sld [smem:[#allocation0]]
  $region89: #{tpu_custom_call.1} parent=0
    _
  %s11 = ssub.s32 1, %s9
  %s12 = scalar_select 0, %s11, %s9
  $region1: #{tpu_custom_call.1} parent=0
    #allocation2 [shape = 'u8[262144]{0}', space=vmem, size = 0x40000, scoped, tag = 'input window, operand 0']
    #allocation3 [shape = 's32[2]{0}', space=sflag, size = 0x8, scoped, tag = 'scoped memory for tpu_custom_call.1']
    #allocation4 [shape = 's32[2]{0}', space=sflag, size = 0x8, scoped, tag = 'scoped memory for tpu_custom_call.1']
    #allocation5 [shape = 'u8[512]{0}', space=vmem, size = 0x400, scoped, tag = 'input window, operand 1, single buffered']
    #allocation6 [shape = 's32[1]{0}', space=sflag, size = 0x4, scoped, tag = 'scoped memory for tpu_custom_call.1']
    #allocation7 [shape = 'u8[512]{0}', space=vmem, size = 0x400, scoped, tag = 'input window, operand 2, single buffered']
    #allocation8 [shape = 'u8[98304]{0}', space=vmem, size = 0x18000, scoped, tag = 'input window, operand 3, single buffered']
    #allocation9 [shape = 's32[1]{0}', space=sflag, size = 0x4, scoped, tag = 'scoped memory for tpu_custom_call.1']
    #allocation10 [shape = 'u8[1536]{0}', space=vmem, size = 0x800, scoped, tag = 'input window, operand 4, single buffered']
    #allocation11 [shape = 'u8[131072]{0}', space=vmem, size = 0x20000, scoped, tag = 'output window, operand 0']
    #allocation12 [shape = 'u8[131072]{0}', space=vmem, size = 0x20000, scoped, tag = 'output window, operand 1']
    #allocation13 [shape = 's32[2]{0}', space=sflag, size = 0x8, scoped, tag = 'scoped memory for tpu_custom_call.1']
    #allocation14 [shape = 'u8[131072]{0}', space=vmem, size = 0x20000, scoped, tag = 'output window, operand 2']
    %13 = vsyncpa [#allocation3], 0
    %s14 = scalar_lea.sflag [#allocation3], 1
    %15 = vsyncpa %s14, 0
    %16 = vsyncpa [#allocation6], 0
    %17 = vsyncpa [#allocation9], 0
    %18 = vsyncpa [#allocation4], 0
    %s19 = scalar_lea.sflag [#allocation4], 1
    %20 = vsyncpa %s19, 0
    %21 = vsyncpa [#allocation13], 0
    %s22 = scalar_lea.sflag [#allocation13], 1
    %23 = vsyncpa %s22, 0
    loop: start=0, step=1, limit=4
    $region2: #{tpu_custom_call.1} parent=1 // loop_pre_header
      _
    $region3: #{tpu_custom_call.1} parent=1 // loop_header
      %s25 = sphi 0, %s29
      %p26 = scmp.ge.s32.totalorder %s25, 4
      %s35 = sphi 0, %s37
      %s38 = sphi 0, %s35
      %s39 = sphi 0, %s38
      %s55 = sphi 0, %s39
      %s59 = sphi 0, %s59
      %s61 = sphi 0, %s59
      %s62 = sphi 0, %s61
      %s76 = sphi 0, %s62
      %s80 = sphi 0, %s80
      %s82 = sphi 0, %s80
      %s83 = sphi 0, %s82
      %s97 = sphi 0, %s83
      %s101 = sphi 0, %s101
      %s103 = sphi 0, %s101
      %s104 = sphi 0, %s103
      %s118 = sphi 0, %s104
      %s122 = sphi 0, %s122
      %s124 = sphi 0, %s122
      %s125 = sphi 0, %s124
      %s139 = sphi 0, %s125
      %s145 = sphi 0, %s147
      %s148 = sphi 0, %s145
      %s149 = sphi 0, %s148
      %s165 = sphi 0, %s149
      %s171 = sphi 0, %s173
      %s174 = sphi 0, %s171
      %s175 = sphi 0, %s174
      %s191 = sphi 0, %s175
      %s197 = sphi 0, %s199
      %s200 = sphi 0, %s197
      %s201 = sphi 0, %s200
      %s217 = sphi 0, %s201
    $region4: #{tpu_custom_call.1} parent=1 // loop_header_branch
      %28 = sbr.rel (%p26) target = $region8
    $region5: #{tpu_custom_call.1} parent=1 // loop_body
      %s30 = ssub.s32 %s25, 1
      %s31 = ssub.s32 %s25, 2
      %s32 = sadd.s32 %s25, 1
      %s33 = ssub.s32 %s25, %s32
      %p34 = scmp.eq.s32.totalorder %s33, 0
      %s36 = sadd.s32 %s35, 1
      %s37 = scalar_select %p34, %s35, %s36
      %p40 = pneg %p34
      %p41 = scmp.eq.s32.totalorder %s25, 1
      %p42 = por %p40, %p41
      %p43 = scmp.ne.s32.totalorder %s35, %s38
      %p44 = scmp.eq.s32.totalorder %s25, 0
      %p45 = por %p43, %p44
      %p46 = scmp.ne.s32.totalorder %s35, %s38
      %p47 = scmp.eq.s32.totalorder %s30, 1
      %p48 = por %p46, %p47
      %p49 = scmp.ne.s32.totalorder %s38, %s39
      %p50 = scmp.eq.s32.totalorder %s30, 0
      %p51 = por %p49, %p50
      %p52 = scmp.ne.s32.totalorder %s38, %s39
      %p53 = scmp.eq.s32.totalorder %s31, 1
      %p54 = por %p52, %p53
      %p56 = scmp.ne.s32.totalorder %s39, %s55
      %p57 = scmp.eq.s32.totalorder %s31, 0
      %p58 = por %p56, %p57
      %s60 = sadd.s32 %s59, 1
      %p63 = scmp.eq.s32.totalorder %s25, 1
      %p64 = scmp.ne.s32.totalorder %s59, %s61
      %p65 = scmp.eq.s32.totalorder %s25, 0
      %p66 = por %p64, %p65
      %p67 = scmp.ne.s32.totalorder %s59, %s61
      %p68 = scmp.eq.s32.totalorder %s30, 1
      %p69 = por %p67, %p68
      %p70 = scmp.ne.s32.totalorder %s61, %s62
      %p71 = scmp.eq.s32.totalorder %s30, 0
      %p72 = por %p70, %p71
      %p73 = scmp.ne.s32.totalorder %s61, %s62
      %p74 = scmp.eq.s32.totalorder %s31, 1
      %p75 = por %p73, %p74
      %p77 = scmp.ne.s32.totalorder %s62, %s76
      %p78 = scmp.eq.s32.totalorder %s31, 0
      %p79 = por %p77, %p78
      %s81 = sadd.s32 %s80, 1
      %p84 = scmp.eq.s32.totalorder %s25, 1
      %p85 = scmp.ne.s32.totalorder %s80, %s82
      %p86 = scmp.eq.s32.totalorder %s25, 0
      %p87 = por %p85, %p86
      %p88 = scmp.ne.s32.totalorder %s80, %s82
      %p89 = scmp.eq.s32.totalorder %s30, 1
      %p90 = por %p88, %p89
      %p91 = scmp.ne.s32.totalorder %s82, %s83
      %p92 = scmp.eq.s32.totalorder %s30, 0
      %p93 = por %p91, %p92
      %p94 = scmp.ne.s32.totalorder %s82, %s83
      %p95 = scmp.eq.s32.totalorder %s31, 1
      %p96 = por %p94, %p95
      %p98 = scmp.ne.s32.totalorder %s83, %s97
      %p99 = scmp.eq.s32.totalorder %s31, 0
      %p100 = por %p98, %p99
      %s102 = sadd.s32 %s101, 1
      %p105 = scmp.eq.s32.totalorder %s25, 1
      %p106 = scmp.ne.s32.totalorder %s101, %s103
      %p107 = scmp.eq.s32.totalorder %s25, 0
      %p108 = por %p106, %p107
      %p109 = scmp.ne.s32.totalorder %s101, %s103
      %p110 = scmp.eq.s32.totalorder %s30, 1
      %p111 = por %p109, %p110
      %p112 = scmp.ne.s32.totalorder %s103, %s104
      %p113 = scmp.eq.s32.totalorder %s30, 0
      %p114 = por %p112, %p113
      %p115 = scmp.ne.s32.totalorder %s103, %s104
      %p116 = scmp.eq.s32.totalorder %s31, 1
      %p117 = por %p115, %p116
      %p119 = scmp.ne.s32.totalorder %s104, %s118
      %p120 = scmp.eq.s32.totalorder %s31, 0
      %p121 = por %p119, %p120
      %s123 = sadd.s32 %s122, 1
      %p126 = scmp.eq.s32.totalorder %s25, 1
      %p127 = scmp.ne.s32.totalorder %s122, %s124
      %p128 = scmp.eq.s32.totalorder %s25, 0
      %p129 = por %p127, %p128
      %p130 = scmp.ne.s32.totalorder %s122, %s124
      %p131 = scmp.eq.s32.totalorder %s30, 1
      %p132 = por %p130, %p131
      %p133 = scmp.ne.s32.totalorder %s124, %s125
      %p134 = scmp.eq.s32.totalorder %s30, 0
      %p135 = por %p133, %p134
      %p136 = scmp.ne.s32.totalorder %s124, %s125
      %p137 = scmp.eq.s32.totalorder %s31, 1
      %p138 = por %p136, %p137
      %p140 = scmp.ne.s32.totalorder %s125, %s139
      %p141 = scmp.eq.s32.totalorder %s31, 0
      %p142 = por %p140, %p141
      %s143 = ssub.s32 %s25, %s32
      %p144 = scmp.eq.s32.totalorder %s143, 0
      %s146 = sadd.s32 %s145, 1
      %s147 = scalar_select %p144, %s145, %s146
      %p150 = pneg %p144
      %p151 = scmp.eq.s32.totalorder %s25, 1
      %p152 = por %p150, %p151
      %p153 = scmp.ne.s32.totalorder %s145, %s148
      %p154 = scmp.eq.s32.totalorder %s25, 0
      %p155 = por %p153, %p154
      %p156 = scmp.ne.s32.totalorder %s145, %s148
      %p157 = scmp.eq.s32.totalorder %s30, 1
      %p158 = por %p156, %p157
      %p159 = scmp.ne.s32.totalorder %s148, %s149
      %p160 = scmp.eq.s32.totalorder %s30, 0
      %p161 = por %p159, %p160
      %p162 = scmp.ne.s32.totalorder %s148, %s149
      %p163 = scmp.eq.s32.totalorder %s31, 1
      %p164 = por %p162, %p163
      %p166 = scmp.ne.s32.totalorder %s149, %s165
      %p167 = scmp.eq.s32.totalorder %s31, 0
      %p168 = por %p166, %p167
      %s169 = ssub.s32 %s25, %s32
      %p170 = scmp.eq.s32.totalorder %s169, 0
      %s172 = sadd.s32 %s171, 1
      %s173 = scalar_select %p170, %s171, %s172
      %p176 = pneg %p170
      %p177 = scmp.eq.s32.totalorder %s25, 1
      %p178 = por %p176, %p177
      %p179 = scmp.ne.s32.totalorder %s171, %s174
      %p180 = scmp.eq.s32.totalorder %s25, 0
      %p181 = por %p179, %p180
      %p182 = scmp.ne.s32.totalorder %s171, %s174
      %p183 = scmp.eq.s32.totalorder %s30, 1
      %p184 = por %p182, %p183
      %p185 = scmp.ne.s32.totalorder %s174, %s175
      %p186 = scmp.eq.s32.totalorder %s30, 0
      %p187 = por %p185, %p186
      %p188 = scmp.ne.s32.totalorder %s174, %s175
      %p189 = scmp.eq.s32.totalorder %s31, 1
      %p190 = por %p188, %p189
      %p192 = scmp.ne.s32.totalorder %s175, %s191
      %p193 = scmp.eq.s32.totalorder %s31, 0
      %p194 = por %p192, %p193
      %s195 = ssub.s32 %s25, %s32
      %p196 = scmp.eq.s32.totalorder %s195, 0
      %s198 = sadd.s32 %s197, 1
      %s199 = scalar_select %p196, %s197, %s198
      %p202 = pneg %p196
      %p203 = scmp.eq.s32.totalorder %s25, 1
      %p204 = por %p202, %p203
      %p205 = scmp.ne.s32.totalorder %s197, %s200
      %p206 = scmp.eq.s32.totalorder %s25, 0
      %p207 = por %p205, %p206
      %p208 = scmp.ne.s32.totalorder %s197, %s200
      %p209 = scmp.eq.s32.totalorder %s30, 1
      %p210 = por %p208, %p209
      %p211 = scmp.ne.s32.totalorder %s200, %s201
      %p212 = scmp.eq.s32.totalorder %s30, 0
      %p213 = por %p211, %p212
      %p214 = scmp.ne.s32.totalorder %s200, %s201
      %p215 = scmp.eq.s32.totalorder %s31, 1
      %p216 = por %p214, %p215
      %p218 = scmp.ne.s32.totalorder %s201, %s217
      %p219 = scmp.eq.s32.totalorder %s31, 0
      %p220 = por %p218, %p219
      %p221 = scmp.le.s32.totalorder 1, %s25
      %p222 = scmp.lt.s32.totalorder %s25, 3
      %p223 = pnand %p221, %p222
      %p224 = pneg %p223
      // Predicated region
      $region9: #{tpu_custom_call.1} parent=5 // pred_check
        _
      $region10: #{tpu_custom_call.1} parent=5 // pred_check_branch
        %226 = sbr.rel (%p223) target = $region12
      $region11: #{tpu_custom_call.1} parent=5 // pred_region
        %s227 = ssub.s32 %s25, 1
        // Predicated region
        $region13: #{tpu_custom_call.1} parent=11 // pred_check
          %p228 = pneg %p72
        $region14: #{tpu_custom_call.1} parent=11 // pred_check_branch
          %230 = sbr.rel (%p228) target = $region16
        $region15: #{tpu_custom_call.1} parent=11 // pred_region
          %s232 = ssub.s32 16, 16
          %233 = vsyncadd [#allocation6], %s232
          %s235 = sshll.u32 [#allocation5], 4
          %s236 = int_to_ptr.vmem [resolvable:$true] %s235
          %238 = dma.hbm_to_vmem [thread:$0]  %s1, 16, %s236, [#allocation6]
        $region16: #{tpu_custom_call.1} parent=11 // pred_fallthru
          _
        // Predicated region
        $region17: #{tpu_custom_call.1} parent=11 // pred_check
          %p239 = pneg %p93
        $region18: #{tpu_custom_call.1} parent=11 // pred_check_branch
          %241 = sbr.rel (%p239) target = $region20
        $region19: #{tpu_custom_call.1} parent=11 // pred_region
          %s243 = ssub.s32 16, 16
          %244 = vsyncadd [#allocation6], %s243
          %s246 = sshll.u32 [#allocation7], 4
          %s247 = int_to_ptr.vmem [resolvable:$true] %s246
          %249 = dma.hbm_to_vmem [thread:$0]  %s2, 16, %s247, [#allocation6]
        $region20: #{tpu_custom_call.1} parent=11 // pred_fallthru
          _
        // Predicated region
        $region21: #{tpu_custom_call.1} parent=11 // pred_check
          %p250 = pneg %p114
        $region22: #{tpu_custom_call.1} parent=11 // pred_check_branch
          %252 = sbr.rel (%p250) target = $region24
        $region23: #{tpu_custom_call.1} parent=11 // pred_region
          %s254 = ssub.s32 3072, 3072
          %255 = vsyncadd [#allocation9], %s254
          %s256 = sshll.u32 [#allocation8], 4
          %s257 = int_to_ptr.vmem [resolvable:$true] %s256
          %262 = dma.hbm_to_vmem [thread:$0]  %s3, 3072, %s257, [#allocation9], 192, 192, 12
        $region24: #{tpu_custom_call.1} parent=11 // pred_fallthru
          _
        // Predicated region
        $region25: #{tpu_custom_call.1} parent=11 // pred_check
          %p263 = pneg %p135
        $region26: #{tpu_custom_call.1} parent=11 // pred_check_branch
          %265 = sbr.rel (%p263) target = $region28
        $region27: #{tpu_custom_call.1} parent=11 // pred_region
          %s267 = ssub.s32 48, 48
          %268 = vsyncadd [#allocation9], %s267
          %s270 = sshll.u32 [#allocation10], 4
          %s271 = int_to_ptr.vmem [resolvable:$true] %s270
          %273 = dma.hbm_to_vmem [thread:$0]  %s4, 48, %s271, [#allocation9]
        $region28: #{tpu_custom_call.1} parent=11 // pred_fallthru
          _
      $region12: #{tpu_custom_call.1} parent=5 // pred_fallthru
        _
      %p274 = scmp.lt.s32.totalorder %s25, 2
      // Predicated region
      $region29: #{tpu_custom_call.1} parent=5 // pred_check
        %p275 = pneg %p274
      $region30: #{tpu_custom_call.1} parent=5 // pred_check_branch
        %277 = sbr.rel (%p275) target = $region32
      $region31: #{tpu_custom_call.1} parent=5 // pred_region
        // Predicated region
        $region33: #{tpu_custom_call.1} parent=31 // pred_check
          %p278 = pneg %p45
        $region34: #{tpu_custom_call.1} parent=31 // pred_check_branch
          %280 = sbr.rel (%p278) target = $region36
        $region35: #{tpu_custom_call.1} parent=31 // pred_region
          %s281 = sand.u32 %s35, 1
          %s282 = scalar_lea.sflag [#allocation3], %s281
          %s283 = sand.u32 %s35, 1
          %s284 = smul.addr %s283, 256
          %s285 = scalar_lea.vmem [#allocation2], %s284
          %s286 = smul.u32 32, %s25
          %s288 = ssub.s32 4096, 4096
          %289 = vsyncadd %s282, %s288
          %s290 = smul.addr %s286, 128
          %s291 = scalar_lea.hbm %s0, %s290
          %s292 = sshll.u32 %s285, 4
          %s293 = int_to_ptr.vmem [resolvable:$true] %s292
          %298 = dma.hbm_to_vmem [thread:$0]  %s291, 4096, %s293, %s282, 128, 128, 8
        $region36: #{tpu_custom_call.1} parent=31 // pred_fallthru
          _
      $region32: #{tpu_custom_call.1} parent=5 // pred_fallthru
        _
      %p299 = scmp.le.s32.totalorder 1, %s25
      %p300 = scmp.lt.s32.totalorder %s25, 3
      %p301 = pnand %p299, %p300
      %p302 = pneg %p301
      // Predicated region
      $region37: #{tpu_custom_call.1} parent=5 // pred_check
        _
      $region38: #{tpu_custom_call.1} parent=5 // pred_check_branch
        %304 = sbr.rel (%p301) target = $region40
      $region39: #{tpu_custom_call.1} parent=5 // pred_region
        %s305 = ssub.s32 %s25, 1
        %s306 = sand.u32 %s38, 1
        %s307 = scalar_lea.sflag [#allocation3], %s306
        %s308 = sand.u32 %s38, 1
        %s309 = smul.addr %s308, 256
        %s310 = scalar_lea.vmem [#allocation2], %s309
        // Predicated region
        $region41: #{tpu_custom_call.1} parent=39 // pred_check
          %p311 = pneg %p51
        $region42: #{tpu_custom_call.1} parent=39 // pred_check_branch
          %313 = sbr.rel (%p311) target = $region44
        $region43: #{tpu_custom_call.1} parent=39 // pred_region
          %314 = dma.done %s307, 4096
        $region44: #{tpu_custom_call.1} parent=39 // pred_fallthru
          _
        // Predicated region
        $region45: #{tpu_custom_call.1} parent=39 // pred_check
          %p315 = pneg %p72
        $region46: #{tpu_custom_call.1} parent=39 // pred_check_branch
          %317 = sbr.rel (%p315) target = $region48
        $region47: #{tpu_custom_call.1} parent=39 // pred_region
          %318 = dma.done [#allocation6], 16
        $region48: #{tpu_custom_call.1} parent=39 // pred_fallthru
          _
        // Predicated region
        $region49: #{tpu_custom_call.1} parent=39 // pred_check
          %p319 = pneg %p93
        $region50: #{tpu_custom_call.1} parent=39 // pred_check_branch
          %321 = sbr.rel (%p319) target = $region52
        $region51: #{tpu_custom_call.1} parent=39 // pred_region
          %322 = dma.done [#allocation6], 16
        $region52: #{tpu_custom_call.1} parent=39 // pred_fallthru
          _
        // Predicated region
        $region53: #{tpu_custom_call.1} parent=39 // pred_check
          %p323 = pneg %p114
        $region54: #{tpu_custom_call.1} parent=39 // pred_check_branch
          %325 = sbr.rel (%p323) target = $region56
        $region55: #{tpu_custom_call.1} parent=39 // pred_region
          %326 = dma.done [#allocation9], 3072
        $region56: #{tpu_custom_call.1} parent=39 // pred_fallthru
          _
        // Predicated region
        $region57: #{tpu_custom_call.1} parent=39 // pred_check
          %p327 = pneg %p135
        $region58: #{tpu_custom_call.1} parent=39 // pred_check_branch
          %329 = sbr.rel (%p327) target = $region60
        $region59: #{tpu_custom_call.1} parent=39 // pred_region
          %330 = dma.done [#allocation9], 48
        $region60: #{tpu_custom_call.1} parent=39 // pred_fallthru
          _
        %s331 = sand.u32 %s38, 1
        %s332 = scalar_lea.sflag [#allocation3], %s331
        %s333 = sand.u32 %s38, 1
        %s334 = smul.addr %s333, 256
        %s335 = scalar_lea.vmem [#allocation2], %s334
        %p336 = pneg %p51
        %p337 = pneg %p48
        %p338 = pneg %p72
        %p339 = pneg %p69
        %p340 = pneg %p93
        %p341 = pneg %p90
        %p342 = pneg %p114
        %p343 = pneg %p111
        %p344 = pneg %p135
        %p345 = pneg %p132
        %p346 = pneg %p161
        %p347 = pneg %p158
        %s348 = sand.u32 %s148, 1
        %s349 = scalar_lea.sflag [#allocation4], %s348
        %s350 = sand.u32 %s148, 1
        %s351 = smul.addr %s350, 128
        %s352 = scalar_lea.vmem [#allocation11], %s351
        %p353 = pneg %p187
        %p354 = pneg %p184
        %s355 = sand.u32 %s30, 1
        %s356 = scalar_lea.sflag [#allocation13], %s355
        %s357 = sand.u32 %s174, 1
        %s358 = smul.addr %s357, 128
        %s359 = scalar_lea.vmem [#allocation12], %s358
        %p360 = pneg %p213
        %p361 = pneg %p210
        %s362 = sand.u32 %s30, 1
        %s363 = scalar_lea.sflag [#allocation13], %s362
        %s364 = sand.u32 %s200, 1
        %s365 = smul.addr %s364, 128
        %s366 = scalar_lea.vmem [#allocation14], %s365
        %s367 = smul.u32 32, %s30
        %s368 = smul.u32 32, %s30
        %s369 = smul.u32 32, %s30
        %s370 = smul.u32 32, %s30
        %v372 = vld [vmem:[%s310] sm:$0xff]
        %v373 = vld [vmem:[%s310 + $0x8] sm:$0xff]
        %v374 = vld [vmem:[%s310 + $0x10] sm:$0xff]
        %v375 = vld [vmem:[%s310 + $0x18] sm:$0xff]
        %v376 = vld [vmem:[%s310 + $0x20] sm:$0xff]
        %v377 = vld [vmem:[%s310 + $0x28] sm:$0xff]
        %v378 = vld [vmem:[%s310 + $0x30] sm:$0xff]
        %v379 = vld [vmem:[%s310 + $0x38] sm:$0xff]
        %v380 = vld [vmem:[%s310 + $0x40] sm:$0xff]
        %v381 = vld [vmem:[%s310 + $0x48] sm:$0xff]
        %v382 = vld [vmem:[%s310 + $0x50] sm:$0xff]
        %v383 = vld [vmem:[%s310 + $0x58] sm:$0xff]
        %v384 = vld [vmem:[%s310 + $0x60] sm:$0xff]
        %v385 = vld [vmem:[%s310 + $0x68] sm:$0xff]
        %v386 = vld [vmem:[%s310 + $0x70] sm:$0xff]
        %v387 = vld [vmem:[%s310 + $0x78] sm:$0xff]
        %v388 = vld [vmem:[%s310 + $0x80] sm:$0xff]
        %v389 = vld [vmem:[%s310 + $0x88] sm:$0xff]
        %v390 = vld [vmem:[%s310 + $0x90] sm:$0xff]
        %v391 = vld [vmem:[%s310 + $0x98] sm:$0xff]
        %v392 = vld [vmem:[%s310 + $0xa0] sm:$0xff]
        %v393 = vld [vmem:[%s310 + $0xa8] sm:$0xff]
        %v394 = vld [vmem:[%s310 + $0xb0] sm:$0xff]
        %v395 = vld [vmem:[%s310 + $0xb8] sm:$0xff]
        %v396 = vld [vmem:[%s310 + $0xc0] sm:$0xff]
        %v397 = vld [vmem:[%s310 + $0xc8] sm:$0xff]
        %v398 = vld [vmem:[%s310 + $0xd0] sm:$0xff]
        %v399 = vld [vmem:[%s310 + $0xd8] sm:$0xff]
        %v400 = vld [vmem:[%s310 + $0xe0] sm:$0xff]
        %v401 = vld [vmem:[%s310 + $0xe8] sm:$0xff]
        %v402 = vld [vmem:[%s310 + $0xf0] sm:$0xff]
        %v403 = vld [vmem:[%s310 + $0xf8] sm:$0xff]
        %v404 = vld [vmem:[#allocation5] sm:$0x1]
        %v405 = vld [vmem:[#allocation7] sm:$0x1]
        %406 = vadd.xlane.f32.xlu0 %v372
        %v407 = vpop.xlane.xlu0 %406
        %408 = vadd.xlane.f32.xlu0 %v373
        %v409 = vpop.xlane.xlu0 %408
        %410 = vadd.xlane.f32.xlu0 %v374
        %v411 = vpop.xlane.xlu0 %410
        %412 = vadd.xlane.f32.xlu0 %v375
        %v413 = vpop.xlane.xlu0 %412
        %414 = vadd.xlane.f32.xlu0 %v376
        %v415 = vpop.xlane.xlu0 %414
        %416 = vadd.xlane.f32.xlu0 %v377
        %v417 = vpop.xlane.xlu0 %416
        %418 = vadd.xlane.f32.xlu0 %v378
        %v419 = vpop.xlane.xlu0 %418
        %420 = vadd.xlane.f32.xlu0 %v379
        %v421 = vpop.xlane.xlu0 %420
        %422 = vadd.xlane.f32.xlu0 %v380
        %v423 = vpop.xlane.xlu0 %422
        %424 = vadd.xlane.f32.xlu0 %v381
        %v425 = vpop.xlane.xlu0 %424
        %426 = vadd.xlane.f32.xlu0 %v382
        %v427 = vpop.xlane.xlu0 %426
        %428 = vadd.xlane.f32.xlu0 %v383
        %v429 = vpop.xlane.xlu0 %428
        %430 = vadd.xlane.f32.xlu0 %v384
        %v431 = vpop.xlane.xlu0 %430
        %432 = vadd.xlane.f32.xlu0 %v385
        %v433 = vpop.xlane.xlu0 %432
        %434 = vadd.xlane.f32.xlu0 %v386
        %v435 = vpop.xlane.xlu0 %434
        %436 = vadd.xlane.f32.xlu0 %v387
        %v437 = vpop.xlane.xlu0 %436
        %438 = vadd.xlane.f32.xlu0 %v388
        %v439 = vpop.xlane.xlu0 %438
        %440 = vadd.xlane.f32.xlu0 %v389
        %v441 = vpop.xlane.xlu0 %440
        %442 = vadd.xlane.f32.xlu0 %v390
        %v443 = vpop.xlane.xlu0 %442
        %444 = vadd.xlane.f32.xlu0 %v391
        %v445 = vpop.xlane.xlu0 %444
        %446 = vadd.xlane.f32.xlu0 %v392
        %v447 = vpop.xlane.xlu0 %446
        %448 = vadd.xlane.f32.xlu0 %v393
        %v449 = vpop.xlane.xlu0 %448
        %450 = vadd.xlane.f32.xlu0 %v394
        %v451 = vpop.xlane.xlu0 %450
        %452 = vadd.xlane.f32.xlu0 %v395
        %v453 = vpop.xlane.xlu0 %452
        %454 = vadd.xlane.f32.xlu0 %v396
        %v455 = vpop.xlane.xlu0 %454
        %456 = vadd.xlane.f32.xlu0 %v397
        %v457 = vpop.xlane.xlu0 %456
        %458 = vadd.xlane.f32.xlu0 %v398
        %v459 = vpop.xlane.xlu0 %458
        %460 = vadd.xlane.f32.xlu0 %v399
        %v461 = vpop.xlane.xlu0 %460
        %462 = vadd.xlane.f32.xlu0 %v400
        %v463 = vpop.xlane.xlu0 %462
        %464 = vadd.xlane.f32.xlu0 %v401
        %v465 = vpop.xlane.xlu0 %464
        %466 = vadd.xlane.f32.xlu0 %v402
        %v467 = vpop.xlane.xlu0 %466
        %468 = vadd.xlane.f32.xlu0 %v403
        %v469 = vpop.xlane.xlu0 %468
        %v470 = vrcp.pop 128.0
        %v471 = vmul.f32 %v407, %v470
        %v472 = vmul.f32 %v409, %v470
        %v473 = vmul.f32 %v411, %v470
        %v474 = vmul.f32 %v413, %v470
        %v475 = vmul.f32 %v415, %v470
        %v476 = vmul.f32 %v417, %v470
        %v477 = vmul.f32 %v419, %v470
        %v478 = vmul.f32 %v421, %v470
        %v479 = vmul.f32 %v423, %v470
        %v480 = vmul.f32 %v425, %v470
        %v481 = vmul.f32 %v427, %v470
        %v482 = vmul.f32 %v429, %v470
        %v483 = vmul.f32 %v431, %v470
        %v484 = vmul.f32 %v433, %v470
        %v485 = vmul.f32 %v435, %v470
        %v486 = vmul.f32 %v437, %v470
        %v487 = vmul.f32 %v439, %v470
        %v488 = vmul.f32 %v441, %v470
        %v489 = vmul.f32 %v443, %v470
        %v490 = vmul.f32 %v445, %v470
        %v491 = vmul.f32 %v447, %v470
        %v492 = vmul.f32 %v449, %v470
        %v493 = vmul.f32 %v451, %v470
        %v494 = vmul.f32 %v453, %v470
        %v495 = vmul.f32 %v455, %v470
        %v496 = vmul.f32 %v457, %v470
        %v497 = vmul.f32 %v459, %v470
        %v498 = vmul.f32 %v461, %v470
        %v499 = vmul.f32 %v463, %v470
        %v500 = vmul.f32 %v465, %v470
        %v501 = vmul.f32 %v467, %v470
        %v502 = vmul.f32 %v469, %v470
        %v503 = vsub.f32 %v372, %v471
        %v504 = vsub.f32 %v373, %v472
        %v505 = vsub.f32 %v374, %v473
        %v506 = vsub.f32 %v375, %v474
        %v507 = vsub.f32 %v376, %v475
        %v508 = vsub.f32 %v377, %v476
        %v509 = vsub.f32 %v378, %v477
        %v510 = vsub.f32 %v379, %v478
        %v511 = vsub.f32 %v380, %v479
        %v512 = vsub.f32 %v381, %v480
        %v513 = vsub.f32 %v382, %v481
        %v514 = vsub.f32 %v383, %v482
        %v515 = vsub.f32 %v384, %v483
        %v516 = vsub.f32 %v385, %v484
        %v517 = vsub.f32 %v386, %v485
        %v518 = vsub.f32 %v387, %v486
        %v519 = vsub.f32 %v388, %v487
        %v520 = vsub.f32 %v389, %v488
        %v521 = vsub.f32 %v390, %v489
        %v522 = vsub.f32 %v391, %v490
        %v523 = vsub.f32 %v392, %v491
        %v524 = vsub.f32 %v393, %v492
        %v525 = vsub.f32 %v394, %v493
        %v526 = vsub.f32 %v395, %v494
        %v527 = vsub.f32 %v396, %v495
        %v528 = vsub.f32 %v397, %v496
        %v529 = vsub.f32 %v398, %v497
        %v530 = vsub.f32 %v399, %v498
        %v531 = vsub.f32 %v400, %v499
        %v532 = vsub.f32 %v401, %v500
        %v533 = vsub.f32 %v402, %v501
        %v534 = vsub.f32 %v403, %v502
        %v535 = vmul.f32 %v503, %v503
        %v536 = vmul.f32 %v504, %v504
        %v537 = vmul.f32 %v505, %v505
        %v538 = vmul.f32 %v506, %v506
        %v539 = vmul.f32 %v507, %v507
        %v540 = vmul.f32 %v508, %v508
        %v541 = vmul.f32 %v509, %v509
        %v542 = vmul.f32 %v510, %v510
        %v543 = vmul.f32 %v511, %v511
        %v544 = vmul.f32 %v512, %v512
        %v545 = vmul.f32 %v513, %v513
        %v546 = vmul.f32 %v514, %v514
        %v547 = vmul.f32 %v515, %v515
        %v548 = vmul.f32 %v516, %v516
        %v549 = vmul.f32 %v517, %v517
        %v550 = vmul.f32 %v518, %v518
        %v551 = vmul.f32 %v519, %v519
        %v552 = vmul.f32 %v520, %v520
        %v553 = vmul.f32 %v521, %v521
        %v554 = vmul.f32 %v522, %v522
        %v555 = vmul.f32 %v523, %v523
        %v556 = vmul.f32 %v524, %v524
        %v557 = vmul.f32 %v525, %v525
        %v558 = vmul.f32 %v526, %v526
        %v559 = vmul.f32 %v527, %v527
        %v560 = vmul.f32 %v528, %v528
        %v561 = vmul.f32 %v529, %v529
        %v562 = vmul.f32 %v530, %v530
        %v563 = vmul.f32 %v531, %v531
        %v564 = vmul.f32 %v532, %v532
        %v565 = vmul.f32 %v533, %v533
        %v566 = vmul.f32 %v534, %v534
        %567 = vadd.xlane.f32.xlu0 %v535
        %v568 = vpop.xlane.xlu0 %567
        %569 = vadd.xlane.f32.xlu0 %v536
        %v570 = vpop.xlane.xlu0 %569
        %571 = vadd.xlane.f32.xlu0 %v537
        %v572 = vpop.xlane.xlu0 %571
        %573 = vadd.xlane.f32.xlu0 %v538
        %v574 = vpop.xlane.xlu0 %573
        %575 = vadd.xlane.f32.xlu0 %v539
        %v576 = vpop.xlane.xlu0 %575
        %577 = vadd.xlane.f32.xlu0 %v540
        %v578 = vpop.xlane.xlu0 %577
        %579 = vadd.xlane.f32.xlu0 %v541
        %v580 = vpop.xlane.xlu0 %579
        %581 = vadd.xlane.f32.xlu0 %v542
        %v582 = vpop.xlane.xlu0 %581
        %583 = vadd.xlane.f32.xlu0 %v543
        %v584 = vpop.xlane.xlu0 %583
        %585 = vadd.xlane.f32.xlu0 %v544
        %v586 = vpop.xlane.xlu0 %585
        %587 = vadd.xlane.f32.xlu0 %v545
        %v588 = vpop.xlane.xlu0 %587
        %589 = vadd.xlane.f32.xlu0 %v546
        %v590 = vpop.xlane.xlu0 %589
        %591 = vadd.xlane.f32.xlu0 %v547
        %v592 = vpop.xlane.xlu0 %591
        %593 = vadd.xlane.f32.xlu0 %v548
        %v594 = vpop.xlane.xlu0 %593
        %595 = vadd.xlane.f32.xlu0 %v549
        %v596 = vpop.xlane.xlu0 %595
        %597 = vadd.xlane.f32.xlu0 %v550
        %v598 = vpop.xlane.xlu0 %597
        %599 = vadd.xlane.f32.xlu0 %v551
        %v600 = vpop.xlane.xlu0 %599
        %601 = vadd.xlane.f32.xlu0 %v552
        %v602 = vpop.xlane.xlu0 %601
        %603 = vadd.xlane.f32.xlu0 %v553
        %v604 = vpop.xlane.xlu0 %603
        %605 = vadd.xlane.f32.xlu0 %v554
        %v606 = vpop.xlane.xlu0 %605
        %607 = vadd.xlane.f32.xlu0 %v555
        %v608 = vpop.xlane.xlu0 %607
        %609 = vadd.xlane.f32.xlu0 %v556
        %v610 = vpop.xlane.xlu0 %609
        %611 = vadd.xlane.f32.xlu0 %v557
        %v612 = vpop.xlane.xlu0 %611
        %613 = vadd.xlane.f32.xlu0 %v558
        %v614 = vpop.xlane.xlu0 %613
        %615 = vadd.xlane.f32.xlu0 %v559
        %v616 = vpop.xlane.xlu0 %615
        %617 = vadd.xlane.f32.xlu0 %v560
        %v618 = vpop.xlane.xlu0 %617
        %619 = vadd.xlane.f32.xlu0 %v561
        %v620 = vpop.xlane.xlu0 %619
        %621 = vadd.xlane.f32.xlu0 %v562
        %v622 = vpop.xlane.xlu0 %621
        %623 = vadd.xlane.f32.xlu0 %v563
        %v624 = vpop.xlane.xlu0 %623
        %625 = vadd.xlane.f32.xlu0 %v564
        %v626 = vpop.xlane.xlu0 %625
        %627 = vadd.xlane.f32.xlu0 %v565
        %v628 = vpop.xlane.xlu0 %627
        %629 = vadd.xlane.f32.xlu0 %v566
        %v630 = vpop.xlane.xlu0 %629
        %v631 = vmul.f32 %v568, %v470
        %v632 = vmul.f32 %v570, %v470
        %v633 = vmul.f32 %v572, %v470
        %v634 = vmul.f32 %v574, %v470
        %v635 = vmul.f32 %v576, %v470
        %v636 = vmul.f32 %v578, %v470
        %v637 = vmul.f32 %v580, %v470
        %v638 = vmul.f32 %v582, %v470
        %v639 = vmul.f32 %v584, %v470
        %v640 = vmul.f32 %v586, %v470
        %v641 = vmul.f32 %v588, %v470
        %v642 = vmul.f32 %v590, %v470
        %v643 = vmul.f32 %v592, %v470
        %v644 = vmul.f32 %v594, %v470
        %v645 = vmul.f32 %v596, %v470
        %v646 = vmul.f32 %v598, %v470
        %v647 = vmul.f32 %v600, %v470
        %v648 = vmul.f32 %v602, %v470
        %v649 = vmul.f32 %v604, %v470
        %v650 = vmul.f32 %v606, %v470
        %v651 = vmul.f32 %v608, %v470
        %v652 = vmul.f32 %v610, %v470
        %v653 = vmul.f32 %v612, %v470
        %v654 = vmul.f32 %v614, %v470
        %v655 = vmul.f32 %v616, %v470
        %v656 = vmul.f32 %v618, %v470
        %v657 = vmul.f32 %v620, %v470
        %v658 = vmul.f32 %v622, %v470
        %v659 = vmul.f32 %v624, %v470
        %v660 = vmul.f32 %v626, %v470
        %v661 = vmul.f32 %v628, %v470
        %v662 = vmul.f32 %v630, %v470
        %v663 = vadd.f32 %v631, 1e-05
        %v664 = vadd.f32 %v632, 1e-05
        %v665 = vadd.f32 %v633, 1e-05
        %v666 = vadd.f32 %v634, 1e-05
        %v667 = vadd.f32 %v635, 1e-05
        %v668 = vadd.f32 %v636, 1e-05
        %v669 = vadd.f32 %v637, 1e-05
        %v670 = vadd.f32 %v638, 1e-05
        %v671 = vadd.f32 %v639, 1e-05
        %v672 = vadd.f32 %v640, 1e-05
        %v673 = vadd.f32 %v641, 1e-05
        %v674 = vadd.f32 %v642, 1e-05
        %v675 = vadd.f32 %v643, 1e-05
        %v676 = vadd.f32 %v644, 1e-05
        %v677 = vadd.f32 %v645, 1e-05
        %v678 = vadd.f32 %v646, 1e-05
        %v679 = vadd.f32 %v647, 1e-05
        %v680 = vadd.f32 %v648, 1e-05
        %v681 = vadd.f32 %v649, 1e-05
        %v682 = vadd.f32 %v650, 1e-05
        %v683 = vadd.f32 %v651, 1e-05
        %v684 = vadd.f32 %v652, 1e-05
        %v685 = vadd.f32 %v653, 1e-05
        %v686 = vadd.f32 %v654, 1e-05
        %v687 = vadd.f32 %v655, 1e-05
        %v688 = vadd.f32 %v656, 1e-05
        %v689 = vadd.f32 %v657, 1e-05
        %v690 = vadd.f32 %v658, 1e-05
        %v691 = vadd.f32 %v659, 1e-05
        %v692 = vadd.f32 %v660, 1e-05
        %v693 = vadd.f32 %v661, 1e-05
        %v694 = vadd.f32 %v662, 1e-05
        %v695 = vrsqrt.pop %v663
        %v696 = vrsqrt.pop %v664
        %v697 = vrsqrt.pop %v665
        %v698 = vrsqrt.pop %v666
        %v699 = vrsqrt.pop %v667
        %v700 = vrsqrt.pop %v668
        %v701 = vrsqrt.pop %v669
        %v702 = vrsqrt.pop %v670
        %v703 = vrsqrt.pop %v671
        %v704 = vrsqrt.pop %v672
        %v705 = vrsqrt.pop %v673
        %v706 = vrsqrt.pop %v674
        %v707 = vrsqrt.pop %v675
        %v708 = vrsqrt.pop %v676
        %v709 = vrsqrt.pop %v677
        %v710 = vrsqrt.pop %v678
        %v711 = vrsqrt.pop %v679
        %v712 = vrsqrt.pop %v680
        %v713 = vrsqrt.pop %v681
        %v714 = vrsqrt.pop %v682
        %v715 = vrsqrt.pop %v683
        %v716 = vrsqrt.pop %v684
        %v717 = vrsqrt.pop %v685
        %v718 = vrsqrt.pop %v686
        %v719 = vrsqrt.pop %v687
        %v720 = vrsqrt.pop %v688
        %v721 = vrsqrt.pop %v689
        %v722 = vrsqrt.pop %v690
        %v723 = vrsqrt.pop %v691
        %v724 = vrsqrt.pop %v692
        %v725 = vrsqrt.pop %v693
        %v726 = vrsqrt.pop %v694
        %v727 = vmul.f32 %v503, %v695
        %v728 = vmul.f32 %v504, %v696
        %v729 = vmul.f32 %v505, %v697
        %v730 = vmul.f32 %v506, %v698
        %v731 = vmul.f32 %v507, %v699
        %v732 = vmul.f32 %v508, %v700
        %v733 = vmul.f32 %v509, %v701
        %v734 = vmul.f32 %v510, %v702
        %v735 = vmul.f32 %v511, %v703
        %v736 = vmul.f32 %v512, %v704
        %v737 = vmul.f32 %v513, %v705
        %v738 = vmul.f32 %v514, %v706
        %v739 = vmul.f32 %v515, %v707
        %v740 = vmul.f32 %v516, %v708
        %v741 = vmul.f32 %v517, %v709
        %v742 = vmul.f32 %v518, %v710
        %v743 = vmul.f32 %v519, %v711
        %v744 = vmul.f32 %v520, %v712
        %v745 = vmul.f32 %v521, %v713
        %v746 = vmul.f32 %v522, %v714
        %v747 = vmul.f32 %v523, %v715
        %v748 = vmul.f32 %v524, %v716
        %v749 = vmul.f32 %v525, %v717
        %v750 = vmul.f32 %v526, %v718
        %v751 = vmul.f32 %v527, %v719
        %v752 = vmul.f32 %v528, %v720
        %v753 = vmul.f32 %v529, %v721
        %v754 = vmul.f32 %v530, %v722
        %v755 = vmul.f32 %v531, %v723
        %v756 = vmul.f32 %v532, %v724
        %v757 = vmul.f32 %v533, %v725
        %v758 = vmul.f32 %v534, %v726
        %v760 = vlaneseq
        %v761 = vshrl.u32 %v760, 7
        %v762 = vsub.s32 0, %v761
        %v763 = vrot.slane %v404, %v762
        %v765 = vmul.f32 %v727, %v763
        %v766 = vmul.f32 %v728, %v763
        %v767 = vmul.f32 %v729, %v763
        %v768 = vmul.f32 %v730, %v763
        %v769 = vmul.f32 %v731, %v763
        %v770 = vmul.f32 %v732, %v763
        %v771 = vmul.f32 %v733, %v763
        %v772 = vmul.f32 %v734, %v763
        %v773 = vmul.f32 %v735, %v763
        %v774 = vmul.f32 %v736, %v763
        %v775 = vmul.f32 %v737, %v763
        %v776 = vmul.f32 %v738, %v763
        %v777 = vmul.f32 %v739, %v763
        %v778 = vmul.f32 %v740, %v763
        %v779 = vmul.f32 %v741, %v763
        %v780 = vmul.f32 %v742, %v763
        %v781 = vmul.f32 %v743, %v763
        %v782 = vmul.f32 %v744, %v763
        %v783 = vmul.f32 %v745, %v763
        %v784 = vmul.f32 %v746, %v763
        %v785 = vmul.f32 %v747, %v763
        %v786 = vmul.f32 %v748, %v763
        %v787 = vmul.f32 %v749, %v763
        %v788 = vmul.f32 %v750, %v763
        %v789 = vmul.f32 %v751, %v763
        %v790 = vmul.f32 %v752, %v763
        %v791 = vmul.f32 %v753, %v763
        %v792 = vmul.f32 %v754, %v763
        %v793 = vmul.f32 %v755, %v763
        %v794 = vmul.f32 %v756, %v763
        %v795 = vmul.f32 %v757, %v763
        %v796 = vmul.f32 %v758, %v763
        %v798 = vlaneseq
        %v799 = vshrl.u32 %v798, 7
        %v800 = vsub.s32 0, %v799
        %v801 = vrot.slane %v405, %v800
        %v803 = vadd.f32 %v765, %v801
        %v804 = vadd.f32 %v766, %v801
        %v805 = vadd.f32 %v767, %v801
        %v806 = vadd.f32 %v768, %v801
        %v807 = vadd.f32 %v769, %v801
        %v808 = vadd.f32 %v770, %v801
        %v809 = vadd.f32 %v771, %v801
        %v810 = vadd.f32 %v772, %v801
        %v811 = vadd.f32 %v773, %v801
        %v812 = vadd.f32 %v774, %v801
        %v813 = vadd.f32 %v775, %v801
        %v814 = vadd.f32 %v776, %v801
        %v815 = vadd.f32 %v777, %v801
        %v816 = vadd.f32 %v778, %v801
        %v817 = vadd.f32 %v779, %v801
        %v818 = vadd.f32 %v780, %v801
        %v819 = vadd.f32 %v781, %v801
        %v820 = vadd.f32 %v782, %v801
        %v821 = vadd.f32 %v783, %v801
        %v822 = vadd.f32 %v784, %v801
        %v823 = vadd.f32 %v785, %v801
        %v824 = vadd.f32 %v786, %v801
        %v825 = vadd.f32 %v787, %v801
        %v826 = vadd.f32 %v788, %v801
        %v827 = vadd.f32 %v789, %v801
        %v828 = vadd.f32 %v790, %v801
        %v829 = vadd.f32 %v791, %v801
        %v830 = vadd.f32 %v792, %v801
        %v831 = vadd.f32 %v793, %v801
        %v832 = vadd.f32 %v794, %v801
        %v833 = vadd.f32 %v795, %v801
        %v834 = vadd.f32 %v796, %v801
        %v835 = vpack.c.bf16 %v804, %v803
        %v836 = vpack.c.bf16 %v806, %v805
        %v837 = vpack.c.bf16 %v808, %v807
        %v838 = vpack.c.bf16 %v810, %v809
        %v839 = vpack.c.bf16 %v812, %v811
        %v840 = vpack.c.bf16 %v814, %v813
        %v841 = vpack.c.bf16 %v816, %v815
        %v842 = vpack.c.bf16 %v818, %v817
        %v843 = vpack.c.bf16 %v820, %v819
        %v844 = vpack.c.bf16 %v822, %v821
        %v845 = vpack.c.bf16 %v824, %v823
        %v846 = vpack.c.bf16 %v826, %v825
        %v847 = vpack.c.bf16 %v828, %v827
        %v848 = vpack.c.bf16 %v830, %v829
        %v849 = vpack.c.bf16 %v832, %v831
        %v850 = vpack.c.bf16 %v834, %v833
        %v851 = vld [vmem:[#allocation8] sm:$0xff]
        %v852 = vld [vmem:[#allocation8 + $0x8] sm:$0xf]
        %v853 = vld [vmem:[#allocation8 + $0xc] sm:$0xff]
        %v854 = vld [vmem:[#allocation8 + $0x14] sm:$0xf]
        %v855 = vld [vmem:[#allocation8 + $0x18] sm:$0xff]
        %v856 = vld [vmem:[#allocation8 + $0x20] sm:$0xf]
        %v857 = vld [vmem:[#allocation8 + $0x24] sm:$0xff]
        %v858 = vld [vmem:[#allocation8 + $0x2c] sm:$0xf]
        %v859 = vld [vmem:[#allocation8 + $0x30] sm:$0xff]
        %v860 = vld [vmem:[#allocation8 + $0x38] sm:$0xf]
        %v861 = vld [vmem:[#allocation8 + $0x3c] sm:$0xff]
        %v862 = vld [vmem:[#allocation8 + $0x44] sm:$0xf]
        %v863 = vld [vmem:[#allocation8 + $0x48] sm:$0xff]
        %v864 = vld [vmem:[#allocation8 + $0x50] sm:$0xf]
        %v865 = vld [vmem:[#allocation8 + $0x54] sm:$0xff]
        %v866 = vld [vmem:[#allocation8 + $0x5c] sm:$0xf]
        %v867 = vld [vmem:[#allocation8 + $0x60] sm:$0xff]
        %v868 = vld [vmem:[#allocation8 + $0x68] sm:$0xf]
        %v869 = vld [vmem:[#allocation8 + $0x6c] sm:$0xff]
        %v870 = vld [vmem:[#allocation8 + $0x74] sm:$0xf]
        %v871 = vld [vmem:[#allocation8 + $0x78] sm:$0xff]
        %v872 = vld [vmem:[#allocation8 + $0x80] sm:$0xf]
        %v873 = vld [vmem:[#allocation8 + $0x84] sm:$0xff]
        %v874 = vld [vmem:[#allocation8 + $0x8c] sm:$0xf]
        %v875 = vld [vmem:[#allocation8 + $0x90] sm:$0xff]
        %v876 = vld [vmem:[#allocation8 + $0x98] sm:$0xf]
        %v877 = vld [vmem:[#allocation8 + $0x9c] sm:$0xff]
        %v878 = vld [vmem:[#allocation8 + $0xa4] sm:$0xf]
        %v879 = vld [vmem:[#allocation8 + $0xa8] sm:$0xff]
        %v880 = vld [vmem:[#allocation8 + $0xb0] sm:$0xf]
        %v881 = vld [vmem:[#allocation8 + $0xb4] sm:$0xff]
        %v882 = vld [vmem:[#allocation8 + $0xbc] sm:$0xf]
        %v883 = vld [vmem:[#allocation10] sm:$0x7]
        %v885 = vlaneseq
        %v886 = vshrl.u32 %v885, 7
        %v887 = vsub.s32 0, %v886
        %v888 = vrot.slane %v883, %v887
        %v889 = vlaneseq
        %v890 = vshrl.u32 %v889, 7
        %v891 = vsub.s32 1, %v890
        %v892 = vrot.slane %v883, %v891
        %v893 = vlaneseq
        %v894 = vshrl.u32 %v893, 7
        %v895 = vsub.s32 2, %v894
        %v896 = vrot.slane %v883, %v895
        %v932 = vunpack.c.l.b16 %v851
        %v933 = vunpack.c.h.b16 %v851
        %v934 = vunpack.c.l.b16 %v852
        %v935 = vunpack.c.l.b16 %v853
        %v936 = vunpack.c.h.b16 %v853
        %v937 = vunpack.c.l.b16 %v854
        %v938 = vunpack.c.l.b16 %v855
        %v939 = vunpack.c.h.b16 %v855
        %v940 = vunpack.c.l.b16 %v856
        %v941 = vunpack.c.l.b16 %v857
        %v942 = vunpack.c.h.b16 %v857
        %v943 = vunpack.c.l.b16 %v858
        %v944 = vunpack.c.l.b16 %v859
        %v945 = vunpack.c.h.b16 %v859
        %v946 = vunpack.c.l.b16 %v860
        %v947 = vunpack.c.l.b16 %v861
        %v948 = vunpack.c.h.b16 %v861
        %v949 = vunpack.c.l.b16 %v862
        %v950 = vunpack.c.l.b16 %v863
        %v951 = vunpack.c.h.b16 %v863
        %v952 = vunpack.c.l.b16 %v864
        %v953 = vunpack.c.l.b16 %v865
        %v954 = vunpack.c.h.b16 %v865
        %v955 = vunpack.c.l.b16 %v866
        %v956 = vunpack.c.l.b16 %v867
        %v957 = vunpack.c.h.b16 %v867
        %v958 = vunpack.c.l.b16 %v868
        %v959 = vunpack.c.l.b16 %v869
        %v960 = vunpack.c.h.b16 %v869
        %v961 = vunpack.c.l.b16 %v870
        %v962 = vunpack.c.l.b16 %v871
        %v963 = vunpack.c.h.b16 %v871
        %v964 = vunpack.c.l.b16 %v872
        %v965 = vunpack.c.l.b16 %v873
        %v966 = vunpack.c.h.b16 %v873
        %v967 = vunpack.c.l.b16 %v874
        %v968 = vunpack.c.l.b16 %v875
        %v969 = vunpack.c.h.b16 %v875
        %v970 = vunpack.c.l.b16 %v876
        %v971 = vunpack.c.l.b16 %v877
        %v972 = vunpack.c.h.b16 %v877
        %v973 = vunpack.c.l.b16 %v878
        %v974 = vunpack.c.l.b16 %v879
        %v975 = vunpack.c.h.b16 %v879
        %v976 = vunpack.c.l.b16 %v880
        %v977 = vunpack.c.l.b16 %v881
        %v978 = vunpack.c.h.b16 %v881
        %v979 = vunpack.c.l.b16 %v882
        %v980 = vpack.c.b16 %v935, %v932
        %v981 = vpack.c.b16 %v936, %v933
        %v982 = vpack.c.b16 %v937, %v934
        %v983 = vpack.c.b16 %v941, %v938
        %v984 = vpack.c.b16 %v942, %v939
        %v985 = vpack.c.b16 %v943, %v940
        %v986 = vpack.c.b16 %v947, %v944
        %v987 = vpack.c.b16 %v948, %v945
        %v988 = vpack.c.b16 %v949, %v946
        %v989 = vpack.c.b16 %v953, %v950
        %v990 = vpack.c.b16 %v954, %v951
        %v991 = vpack.c.b16 %v955, %v952
        %v992 = vpack.c.b16 %v959, %v956
        %v993 = vpack.c.b16 %v960, %v957
        %v994 = vpack.c.b16 %v961, %v958
        %v995 = vpack.c.b16 %v965, %v962
        %v996 = vpack.c.b16 %v966, %v963
        %v997 = vpack.c.b16 %v967, %v964
        %v998 = vpack.c.b16 %v971, %v968
        %v999 = vpack.c.b16 %v972, %v969
        %v1000 = vpack.c.b16 %v973, %v970
        %v1001 = vpack.c.b16 %v977, %v974
        %v1002 = vpack.c.b16 %v978, %v975
        %v1003 = vpack.c.b16 %v979, %v976
        %1028 = vmatprep.subr.bf16.mxu0 %v981
        %1029 = vmatpush1.bf16.msra.mxu0 %v980
        %1030 = vmatprep.subr.bf16.mxu0 %v984
        %1031 = vmatpush1.bf16.msra.mxu0 %v983
        %1032 = vmatprep.subr.bf16.mxu0 %v987
        %1033 = vmatpush1.bf16.msra.mxu0 %v986
        %1034 = vmatprep.subr.bf16.mxu0 %v990
        %1035 = vmatpush1.bf16.msra.mxu0 %v989
        %1036 = vmatprep.subr.bf16.mxu0 %v993
        %1037 = vmatpush1.bf16.msra.mxu0 %v992
        %1038 = vmatprep.subr.bf16.mxu0 %v996
        %1039 = vmatpush1.bf16.msra.mxu0 %v995
        %1040 = vmatprep.subr.bf16.mxu0 %v999
        %1041 = vmatpush1.bf16.msra.mxu0 %v998
        %1042 = vmatprep.subr.bf16.mxu0 %v1002
        %1043 = vmatpush1.bf16.msra.mxu0 %v1001
        %1044 = vmatprep.subr.bf16.mxu0 0
        %1045 = vmatpush1.bf16.msra.mxu0 0
        %1046 = vmatprep.subr.bf16.mxu0 0
        %1047 = vmatpush1.bf16.msra.mxu0 0
        %1048 = vmatprep.subr.bf16.mxu0 0
        %1049 = vmatpush1.bf16.msra.mxu0 0
        %1050 = vmatprep.subr.bf16.mxu0 0
        %1051 = vmatpush1.bf16.msra.mxu0 0
        %1052 = vmatprep.subr.bf16.mxu0 0
        %1053 = vmatpush1.bf16.msra.mxu0 0
        %1054 = vmatprep.subr.bf16.mxu0 0
        %1055 = vmatpush1.bf16.msra.mxu0 0
        %1056 = vmatprep.subr.bf16.mxu0 0
        %1057 = vmatpush1.bf16.msra.mxu0 0
        %1058 = vmatprep.subr.bf16.mxu0 0
        %1059 = vmatpush1.bf16.msra.mxu0 0
        %1060 = vmatprep.mubr.bf16.mxu0 0
        %1061 = vmatmul.mubr.bf16.gmra.mrb[0].mxu0 %v835
        %v1062 = vpop.f32.mrb[0].mxu0
        %v1063 = vadd.f32 %v888, %v1062
        %v1064 = vpop.f32.mrb[0].mxu0
        %v1065 = vadd.f32 %v892, %v1064
        %v1066 = vpop.f32.mrb[0].mxu0
        %v1067 = vadd.f32 %v888, %v1066
        %v1068 = vpop.f32.mrb[0].mxu0
        %v1069 = vadd.f32 %v892, %v1068
        %1070 = vmatprep.mubr.bf16.mxu0 0
        %1071 = vmatmul.mubr.bf16.gmra.mrb[0].mxu0 %v836
        %v1072 = vpop.f32.mrb[0].mxu0
        %v1073 = vadd.f32 %v888, %v1072
        %v1074 = vpop.f32.mrb[0].mxu0
        %v1075 = vadd.f32 %v892, %v1074
        %v1076 = vpop.f32.mrb[0].mxu0
        %v1077 = vadd.f32 %v888, %v1076
        %v1078 = vpop.f32.mrb[0].mxu0
        %v1079 = vadd.f32 %v892, %v1078
        %1080 = vmatprep.mubr.bf16.mxu0 0
        %1081 = vmatmul.mubr.bf16.gmra.mrb[0].mxu0 %v837
        %v1082 = vpop.f32.mrb[0].mxu0
        %v1083 = vadd.f32 %v888, %v1082
        %v1084 = vpop.f32.mrb[0].mxu0
        %v1085 = vadd.f32 %v892, %v1084
        %v1086 = vpop.f32.mrb[0].mxu0
        %v1087 = vadd.f32 %v888, %v1086
        %v1088 = vpop.f32.mrb[0].mxu0
        %v1089 = vadd.f32 %v892, %v1088
        %1090 = vmatprep.mubr.bf16.mxu0 0
        %1091 = vmatmul.mubr.bf16.gmra.mrb[0].mxu0 %v838
        %v1092 = vpop.f32.mrb[0].mxu0
        %v1093 = vadd.f32 %v888, %v1092
        %v1094 = vpop.f32.mrb[0].mxu0
        %v1095 = vadd.f32 %v892, %v1094
        %v1096 = vpop.f32.mrb[0].mxu0
        %v1097 = vadd.f32 %v888, %v1096
        %v1098 = vpop.f32.mrb[0].mxu0
        %v1099 = vadd.f32 %v892, %v1098
        %1100 = vmatprep.mubr.bf16.mxu0 0
        %1101 = vmatmul.mubr.bf16.gmra.mrb[0].mxu0 %v839
        %v1102 = vpop.f32.mrb[0].mxu0
        %v1103 = vadd.f32 %v888, %v1102
        %v1104 = vpop.f32.mrb[0].mxu0
        %v1105 = vadd.f32 %v892, %v1104
        %v1106 = vpop.f32.mrb[0].mxu0
        %v1107 = vadd.f32 %v888, %v1106
        %v1108 = vpop.f32.mrb[0].mxu0
        %v1109 = vadd.f32 %v892, %v1108
        %1110 = vmatprep.mubr.bf16.mxu0 0
        %1111 = vmatmul.mubr.bf16.gmra.mrb[0].mxu0 %v840
        %v1112 = vpop.f32.mrb[0].mxu0
        %v1113 = vadd.f32 %v888, %v1112
        %v1114 = vpop.f32.mrb[0].mxu0
        %v1115 = vadd.f32 %v892, %v1114
        %v1116 = vpop.f32.mrb[0].mxu0
        %v1117 = vadd.f32 %v888, %v1116
        %v1118 = vpop.f32.mrb[0].mxu0
        %v1119 = vadd.f32 %v892, %v1118
        %1120 = vmatprep.mubr.bf16.mxu0 0
        %1121 = vmatmul.mubr.bf16.gmra.mrb[0].mxu0 %v841
        %v1122 = vpop.f32.mrb[0].mxu0
        %v1123 = vadd.f32 %v888, %v1122
        %v1124 = vpop.f32.mrb[0].mxu0
        %v1125 = vadd.f32 %v892, %v1124
        %v1126 = vpop.f32.mrb[0].mxu0
        %v1127 = vadd.f32 %v888, %v1126
        %v1128 = vpop.f32.mrb[0].mxu0
        %v1129 = vadd.f32 %v892, %v1128
        %1130 = vmatprep.mubr.bf16.mxu0 0
        %1131 = vmatmul.mubr.bf16.gmra.mrb[0].mxu0 %v842
        %v1132 = vpop.f32.mrb[0].mxu0
        %v1133 = vadd.f32 %v888, %v1132
        %v1134 = vpop.f32.mrb[0].mxu0
        %v1135 = vadd.f32 %v892, %v1134
        %v1136 = vpop.f32.mrb[0].mxu0
        %v1137 = vadd.f32 %v888, %v1136
        %v1138 = vpop.f32.mrb[0].mxu0
        %v1139 = vadd.f32 %v892, %v1138
        %1140 = vmatprep.mubr.bf16.mxu0 0
        %1141 = vmatmul.mubr.bf16.gmra.mrb[0].mxu0 %v843
        %v1142 = vpop.f32.mrb[0].mxu0
        %v1143 = vadd.f32 %v888, %v1142
        %v1144 = vpop.f32.mrb[0].mxu0
        %v1145 = vadd.f32 %v892, %v1144
        %v1146 = vpop.f32.mrb[0].mxu0
        %v1147 = vadd.f32 %v888, %v1146
        %v1148 = vpop.f32.mrb[0].mxu0
        %v1149 = vadd.f32 %v892, %v1148
        %1150 = vmatprep.mubr.bf16.mxu0 0
        %1151 = vmatmul.mubr.bf16.gmra.mrb[0].mxu0 %v844
        %v1152 = vpop.f32.mrb[0].mxu0
        %v1153 = vadd.f32 %v888, %v1152
        %v1154 = vpop.f32.mrb[0].mxu0
        %v1155 = vadd.f32 %v892, %v1154
        %v1156 = vpop.f32.mrb[0].mxu0
        %v1157 = vadd.f32 %v888, %v1156
        %v1158 = vpop.f32.mrb[0].mxu0
        %v1159 = vadd.f32 %v892, %v1158
        %1160 = vmatprep.mubr.bf16.mxu0 0
        %1161 = vmatmul.mubr.bf16.gmra.mrb[0].mxu0 %v845
        %v1162 = vpop.f32.mrb[0].mxu0
        %v1163 = vadd.f32 %v888, %v1162
        %v1164 = vpop.f32.mrb[0].mxu0
        %v1165 = vadd.f32 %v892, %v1164
        %v1166 = vpop.f32.mrb[0].mxu0
        %v1167 = vadd.f32 %v888, %v1166
        %v1168 = vpop.f32.mrb[0].mxu0
        %v1169 = vadd.f32 %v892, %v1168
        %1170 = vmatprep.mubr.bf16.mxu0 0
        %1171 = vmatmul.mubr.bf16.gmra.mrb[0].mxu0 %v846
        %v1172 = vpop.f32.mrb[0].mxu0
        %v1173 = vadd.f32 %v888, %v1172
        %v1174 = vpop.f32.mrb[0].mxu0
        %v1175 = vadd.f32 %v892, %v1174
        %v1176 = vpop.f32.mrb[0].mxu0
        %v1177 = vadd.f32 %v888, %v1176
        %v1178 = vpop.f32.mrb[0].mxu0
        %v1179 = vadd.f32 %v892, %v1178
        %1180 = vmatprep.mubr.bf16.mxu0 0
        %1181 = vmatmul.mubr.bf16.gmra.mrb[0].mxu0 %v847
        %v1182 = vpop.f32.mrb[0].mxu0
        %v1183 = vadd.f32 %v888, %v1182
        %v1184 = vpop.f32.mrb[0].mxu0
        %v1185 = vadd.f32 %v892, %v1184
        %v1186 = vpop.f32.mrb[0].mxu0
        %v1187 = vadd.f32 %v888, %v1186
        %v1188 = vpop.f32.mrb[0].mxu0
        %v1189 = vadd.f32 %v892, %v1188
        %1190 = vmatprep.mubr.bf16.mxu0 0
        %1191 = vmatmul.mubr.bf16.gmra.mrb[0].mxu0 %v848
        %v1192 = vpop.f32.mrb[0].mxu0
        %v1193 = vadd.f32 %v888, %v1192
        %v1194 = vpop.f32.mrb[0].mxu0
        %v1195 = vadd.f32 %v892, %v1194
        %v1196 = vpop.f32.mrb[0].mxu0
        %v1197 = vadd.f32 %v888, %v1196
        %v1198 = vpop.f32.mrb[0].mxu0
        %v1199 = vadd.f32 %v892, %v1198
        %1200 = vmatprep.mubr.bf16.mxu0 0
        %1201 = vmatmul.mubr.bf16.gmra.mrb[0].mxu0 %v849
        %v1202 = vpop.f32.mrb[0].mxu0
        %v1203 = vadd.f32 %v888, %v1202
        %v1204 = vpop.f32.mrb[0].mxu0
        %v1205 = vadd.f32 %v892, %v1204
        %v1206 = vpop.f32.mrb[0].mxu0
        %v1207 = vadd.f32 %v888, %v1206
        %v1208 = vpop.f32.mrb[0].mxu0
        %v1209 = vadd.f32 %v892, %v1208
        %1210 = vmatprep.mubr.bf16.mxu0 0
        %1211 = vmatmul.mubr.bf16.gmra.mrb[0].mxu0 %v850
        %v1212 = vpop.f32.mrb[0].mxu0
        %v1213 = vadd.f32 %v888, %v1212
        %v1214 = vpop.f32.mrb[0].mxu0
        %v1215 = vadd.f32 %v892, %v1214
        %v1216 = vpop.f32.mrb[0].mxu0
        %v1217 = vadd.f32 %v888, %v1216
        %v1218 = vpop.f32.mrb[0].mxu0
        %v1219 = vadd.f32 %v892, %v1218
        %1220 = vdwg.mxu0
        %1221 = vmatprep.subr.bf16.mxu0 0
        %1222 = vmatpush1.bf16.msra.mxu0 %v982
        %1223 = vmatprep.subr.bf16.mxu0 0
        %1224 = vmatpush1.bf16.msra.mxu0 %v985
        %1225 = vmatprep.subr.bf16.mxu0 0
        %1226 = vmatpush1.bf16.msra.mxu0 %v988
        %1227 = vmatprep.subr.bf16.mxu0 0
        %1228 = vmatpush1.bf16.msra.mxu0 %v991
        %1229 = vmatprep.subr.bf16.mxu0 0
        %1230 = vmatpush1.bf16.msra.mxu0 %v994
        %1231 = vmatprep.subr.bf16.mxu0 0
        %1232 = vmatpush1.bf16.msra.mxu0 %v997
        %1233 = vmatprep.subr.bf16.mxu0 0
        %1234 = vmatpush1.bf16.msra.mxu0 %v1000
        %1235 = vmatprep.subr.bf16.mxu0 0
        %1236 = vmatpush1.bf16.msra.mxu0 %v1003
        %1237 = vmatprep.subr.bf16.mxu0 0
        %1238 = vmatpush1.bf16.msra.mxu0 0
        %1239 = vmatprep.subr.bf16.mxu0 0
        %1240 = vmatpush1.bf16.msra.mxu0 0
        %1241 = vmatprep.subr.bf16.mxu0 0
        %1242 = vmatpush1.bf16.msra.mxu0 0
        %1243 = vmatprep.subr.bf16.mxu0 0
        %1244 = vmatpush1.bf16.msra.mxu0 0
        %1245 = vmatprep.subr.bf16.mxu0 0
        %1246 = vmatpush1.bf16.msra.mxu0 0
        %1247 = vmatprep.subr.bf16.mxu0 0
        %1248 = vmatpush1.bf16.msra.mxu0 0
        %1249 = vmatprep.subr.bf16.mxu0 0
        %1250 = vmatpush1.bf16.msra.mxu0 0
        %1251 = vmatprep.subr.bf16.mxu0 0
        %1252 = vmatpush1.bf16.msra.mxu0 0
        %1253 = vmatprep.mubr.bf16.mxu0 0
        %1254 = vmatmul.mubr.bf16.gmra.mrb[0].mxu0 %v835
        %v1255 = vpop.f32.mrb[0].mxu0
        %v1256 = vadd.f32 %v896, %v1255
        %v1257 = vpop.f32.mrb[0].mxu0
        %v1258 = vpop.f32.mrb[0].mxu0
        %v1259 = vadd.f32 %v896, %v1258
        %v1260 = vpop.f32.mrb[0].mxu0
        %1261 = vmatprep.mubr.bf16.mxu0 0
        %1262 = vmatmul.mubr.bf16.gmra.mrb[0].mxu0 %v836
        %v1263 = vpop.f32.mrb[0].mxu0
        %v1264 = vadd.f32 %v896, %v1263
        %v1265 = vpop.f32.mrb[0].mxu0
        %v1266 = vpop.f32.mrb[0].mxu0
        %v1267 = vadd.f32 %v896, %v1266
        %v1268 = vpop.f32.mrb[0].mxu0
        %1269 = vmatprep.mubr.bf16.mxu0 0
        %1270 = vmatmul.mubr.bf16.gmra.mrb[0].mxu0 %v837
        %v1271 = vpop.f32.mrb[0].mxu0
        %v1272 = vadd.f32 %v896, %v1271
        %v1273 = vpop.f32.mrb[0].mxu0
        %v1274 = vpop.f32.mrb[0].mxu0
        %v1275 = vadd.f32 %v896, %v1274
        %v1276 = vpop.f32.mrb[0].mxu0
        %1277 = vmatprep.mubr.bf16.mxu0 0
        %1278 = vmatmul.mubr.bf16.gmra.mrb[0].mxu0 %v838
        %v1279 = vpop.f32.mrb[0].mxu0
        %v1280 = vadd.f32 %v896, %v1279
        %v1281 = vpop.f32.mrb[0].mxu0
        %v1282 = vpop.f32.mrb[0].mxu0
        %v1283 = vadd.f32 %v896, %v1282
        %v1284 = vpop.f32.mrb[0].mxu0
        %1285 = vmatprep.mubr.bf16.mxu0 0
        %1286 = vmatmul.mubr.bf16.gmra.mrb[0].mxu0 %v839
        %v1287 = vpop.f32.mrb[0].mxu0
        %v1288 = vadd.f32 %v896, %v1287
        %v1289 = vpop.f32.mrb[0].mxu0
        %v1290 = vpop.f32.mrb[0].mxu0
        %v1291 = vadd.f32 %v896, %v1290
        %v1292 = vpop.f32.mrb[0].mxu0
        %1293 = vmatprep.mubr.bf16.mxu0 0
        %1294 = vmatmul.mubr.bf16.gmra.mrb[0].mxu0 %v840
        %v1295 = vpop.f32.mrb[0].mxu0
        %v1296 = vadd.f32 %v896, %v1295
        %v1297 = vpop.f32.mrb[0].mxu0
        %v1298 = vpop.f32.mrb[0].mxu0
        %v1299 = vadd.f32 %v896, %v1298
        %v1300 = vpop.f32.mrb[0].mxu0
        %1301 = vmatprep.mubr.bf16.mxu0 0
        %1302 = vmatmul.mubr.bf16.gmra.mrb[0].mxu0 %v841
        %v1303 = vpop.f32.mrb[0].mxu0
        %v1304 = vadd.f32 %v896, %v1303
        %v1305 = vpop.f32.mrb[0].mxu0
        %v1306 = vpop.f32.mrb[0].mxu0
        %v1307 = vadd.f32 %v896, %v1306
        %v1308 = vpop.f32.mrb[0].mxu0
        %1309 = vmatprep.mubr.bf16.mxu0 0
        %1310 = vmatmul.mubr.bf16.gmra.mrb[0].mxu0 %v842
        %v1311 = vpop.f32.mrb[0].mxu0
        %v1312 = vadd.f32 %v896, %v1311
        %v1313 = vpop.f32.mrb[0].mxu0
        %v1314 = vpop.f32.mrb[0].mxu0
        %v1315 = vadd.f32 %v896, %v1314
        %v1316 = vpop.f32.mrb[0].mxu0
        %1317 = vmatprep.mubr.bf16.mxu0 0
        %1318 = vmatmul.mubr.bf16.gmra.mrb[0].mxu0 %v843
        %v1319 = vpop.f32.mrb[0].mxu0
        %v1320 = vadd.f32 %v896, %v1319
        %v1321 = vpop.f32.mrb[0].mxu0
        %v1322 = vpop.f32.mrb[0].mxu0
        %v1323 = vadd.f32 %v896, %v1322
        %v1324 = vpop.f32.mrb[0].mxu0
        %1325 = vmatprep.mubr.bf16.mxu0 0
        %1326 = vmatmul.mubr.bf16.gmra.mrb[0].mxu0 %v844
        %v1327 = vpop.f32.mrb[0].mxu0
        %v1328 = vadd.f32 %v896, %v1327
        %v1329 = vpop.f32.mrb[0].mxu0
        %v1330 = vpop.f32.mrb[0].mxu0
        %v1331 = vadd.f32 %v896, %v1330
        %v1332 = vpop.f32.mrb[0].mxu0
        %1333 = vmatprep.mubr.bf16.mxu0 0
        %1334 = vmatmul.mubr.bf16.gmra.mrb[0].mxu0 %v845
        %v1335 = vpop.f32.mrb[0].mxu0
        %v1336 = vadd.f32 %v896, %v1335
        %v1337 = vpop.f32.mrb[0].mxu0
        %v1338 = vpop.f32.mrb[0].mxu0
        %v1339 = vadd.f32 %v896, %v1338
        %v1340 = vpop.f32.mrb[0].mxu0
        %1341 = vmatprep.mubr.bf16.mxu0 0
        %1342 = vmatmul.mubr.bf16.gmra.mrb[0].mxu0 %v846
        %v1343 = vpop.f32.mrb[0].mxu0
        %v1344 = vadd.f32 %v896, %v1343
        %v1345 = vpop.f32.mrb[0].mxu0
        %v1346 = vpop.f32.mrb[0].mxu0
        %v1347 = vadd.f32 %v896, %v1346
        %v1348 = vpop.f32.mrb[0].mxu0
        %1349 = vmatprep.mubr.bf16.mxu0 0
        %1350 = vmatmul.mubr.bf16.gmra.mrb[0].mxu0 %v847
        %v1351 = vpop.f32.mrb[0].mxu0
        %v1352 = vadd.f32 %v896, %v1351
        %v1353 = vpop.f32.mrb[0].mxu0
        %v1354 = vpop.f32.mrb[0].mxu0
        %v1355 = vadd.f32 %v896, %v1354
        %v1356 = vpop.f32.mrb[0].mxu0
        %1357 = vmatprep.mubr.bf16.mxu0 0
        %1358 = vmatmul.mubr.bf16.gmra.mrb[0].mxu0 %v848
        %v1359 = vpop.f32.mrb[0].mxu0
        %v1360 = vadd.f32 %v896, %v1359
        %v1361 = vpop.f32.mrb[0].mxu0
        %v1362 = vpop.f32.mrb[0].mxu0
        %v1363 = vadd.f32 %v896, %v1362
        %v1364 = vpop.f32.mrb[0].mxu0
        %1365 = vmatprep.mubr.bf16.mxu0 0
        %1366 = vmatmul.mubr.bf16.gmra.mrb[0].mxu0 %v849
        %v1367 = vpop.f32.mrb[0].mxu0
        %v1368 = vadd.f32 %v896, %v1367
        %v1369 = vpop.f32.mrb[0].mxu0
        %v1370 = vpop.f32.mrb[0].mxu0
        %v1371 = vadd.f32 %v896, %v1370
        %v1372 = vpop.f32.mrb[0].mxu0
        %1373 = vmatprep.mubr.bf16.mxu0 0
        %1374 = vmatmul.mubr.bf16.gmra.mrb[0].mxu0 %v850
        %v1375 = vpop.f32.mrb[0].mxu0
        %v1376 = vadd.f32 %v896, %v1375
        %v1377 = vpop.f32.mrb[0].mxu0
        %v1378 = vpop.f32.mrb[0].mxu0
        %v1379 = vadd.f32 %v896, %v1378
        %v1380 = vpop.f32.mrb[0].mxu0
        %1381 = vdwg.mxu0
        %v1382 = vpack.c.bf16 %v1067, %v1063
        %v1383 = vpack.c.bf16 %v1077, %v1073
        %v1384 = vpack.c.bf16 %v1087, %v1083
        %v1385 = vpack.c.bf16 %v1097, %v1093
        %v1386 = vpack.c.bf16 %v1107, %v1103
        %v1387 = vpack.c.bf16 %v1117, %v1113
        %v1388 = vpack.c.bf16 %v1127, %v1123
        %v1389 = vpack.c.bf16 %v1137, %v1133
        %v1390 = vpack.c.bf16 %v1147, %v1143
        %v1391 = vpack.c.bf16 %v1157, %v1153
        %v1392 = vpack.c.bf16 %v1167, %v1163
        %v1393 = vpack.c.bf16 %v1177, %v1173
        %v1394 = vpack.c.bf16 %v1187, %v1183
        %v1395 = vpack.c.bf16 %v1197, %v1193
        %v1396 = vpack.c.bf16 %v1207, %v1203
        %v1397 = vpack.c.bf16 %v1217, %v1213
        %v1414 = vunpack.c.l.b16 %v1382
        %v1415 = vunpack.c.h.b16 %v1382
        %v1416 = vunpack.c.l.b16 %v1383
        %v1417 = vunpack.c.h.b16 %v1383
        %v1418 = vunpack.c.l.b16 %v1384
        %v1419 = vunpack.c.h.b16 %v1384
        %v1420 = vunpack.c.l.b16 %v1385
        %v1421 = vunpack.c.h.b16 %v1385
        %v1422 = vunpack.c.l.b16 %v1386
        %v1423 = vunpack.c.h.b16 %v1386
        %v1424 = vunpack.c.l.b16 %v1387
        %v1425 = vunpack.c.h.b16 %v1387
        %v1426 = vunpack.c.l.b16 %v1388
        %v1427 = vunpack.c.h.b16 %v1388
        %v1428 = vunpack.c.l.b16 %v1389
        %v1429 = vunpack.c.h.b16 %v1389
        %v1430 = vunpack.c.l.b16 %v1390
        %v1431 = vunpack.c.h.b16 %v1390
        %v1432 = vunpack.c.l.b16 %v1391
        %v1433 = vunpack.c.h.b16 %v1391
        %v1434 = vunpack.c.l.b16 %v1392
        %v1435 = vunpack.c.h.b16 %v1392
        %v1436 = vunpack.c.l.b16 %v1393
        %v1437 = vunpack.c.h.b16 %v1393
        %v1438 = vunpack.c.l.b16 %v1394
        %v1439 = vunpack.c.h.b16 %v1394
        %v1440 = vunpack.c.l.b16 %v1395
        %v1441 = vunpack.c.h.b16 %v1395
        %v1442 = vunpack.c.l.b16 %v1396
        %v1443 = vunpack.c.h.b16 %v1396
        %v1444 = vunpack.c.l.b16 %v1397
        %v1445 = vunpack.c.h.b16 %v1397
        %v1446 = vpack.c.b16 %v1414, %v1414
        %v1447 = vpack.c.b16 %v1415, %v1415
        %v1448 = vpack.c.b16 %v1416, %v1416
        %v1449 = vpack.c.b16 %v1417, %v1417
        %v1450 = vpack.c.b16 %v1418, %v1418
        %v1451 = vpack.c.b16 %v1419, %v1419
        %v1452 = vpack.c.b16 %v1420, %v1420
        %v1453 = vpack.c.b16 %v1421, %v1421
        %v1454 = vpack.c.b16 %v1422, %v1422
        %v1455 = vpack.c.b16 %v1423, %v1423
        %v1456 = vpack.c.b16 %v1424, %v1424
        %v1457 = vpack.c.b16 %v1425, %v1425
        %v1458 = vpack.c.b16 %v1426, %v1426
        %v1459 = vpack.c.b16 %v1427, %v1427
        %v1460 = vpack.c.b16 %v1428, %v1428
        %v1461 = vpack.c.b16 %v1429, %v1429
        %v1462 = vpack.c.b16 %v1430, %v1430
        %v1463 = vpack.c.b16 %v1431, %v1431
        %v1464 = vpack.c.b16 %v1432, %v1432
        %v1465 = vpack.c.b16 %v1433, %v1433
        %v1466 = vpack.c.b16 %v1434, %v1434
        %v1467 = vpack.c.b16 %v1435, %v1435
        %v1468 = vpack.c.b16 %v1436, %v1436
        %v1469 = vpack.c.b16 %v1437, %v1437
        %v1470 = vpack.c.b16 %v1438, %v1438
        %v1471 = vpack.c.b16 %v1439, %v1439
        %v1472 = vpack.c.b16 %v1440, %v1440
        %v1473 = vpack.c.b16 %v1441, %v1441
        %v1474 = vpack.c.b16 %v1442, %v1442
        %v1475 = vpack.c.b16 %v1443, %v1443
        %v1476 = vpack.c.b16 %v1444, %v1444
        %v1477 = vpack.c.b16 %v1445, %v1445
        %1510 = vst [vmem:[%s352] sm:$0xf] %v1446
        %1511 = vst [vmem:[%s352 + $0x4] sm:$0xf] %v1447
        %1512 = vst [vmem:[%s352 + $0x8] sm:$0xf] %v1448
        %1513 = vst [vmem:[%s352 + $0xc] sm:$0xf] %v1449
        %1514 = vst [vmem:[%s352 + $0x10] sm:$0xf] %v1450
        %1515 = vst [vmem:[%s352 + $0x14] sm:$0xf] %v1451
        %1516 = vst [vmem:[%s352 + $0x18] sm:$0xf] %v1452
        %1517 = vst [vmem:[%s352 + $0x1c] sm:$0xf] %v1453
        %1518 = vst [vmem:[%s352 + $0x20] sm:$0xf] %v1454
        %1519 = vst [vmem:[%s352 + $0x24] sm:$0xf] %v1455
        %1520 = vst [vmem:[%s352 + $0x28] sm:$0xf] %v1456
        %1521 = vst [vmem:[%s352 + $0x2c] sm:$0xf] %v1457
        %1522 = vst [vmem:[%s352 + $0x30] sm:$0xf] %v1458
        %1523 = vst [vmem:[%s352 + $0x34] sm:$0xf] %v1459
        %1524 = vst [vmem:[%s352 + $0x38] sm:$0xf] %v1460
        %1525 = vst [vmem:[%s352 + $0x3c] sm:$0xf] %v1461
        %1526 = vst [vmem:[%s352 + $0x40] sm:$0xf] %v1462
        %1527 = vst [vmem:[%s352 + $0x44] sm:$0xf] %v1463
        %1528 = vst [vmem:[%s352 + $0x48] sm:$0xf] %v1464
        %1529 = vst [vmem:[%s352 + $0x4c] sm:$0xf] %v1465
        %1530 = vst [vmem:[%s352 + $0x50] sm:$0xf] %v1466
        %1531 = vst [vmem:[%s352 + $0x54] sm:$0xf] %v1467
        %1532 = vst [vmem:[%s352 + $0x58] sm:$0xf] %v1468
        %1533 = vst [vmem:[%s352 + $0x5c] sm:$0xf] %v1469
        %1534 = vst [vmem:[%s352 + $0x60] sm:$0xf] %v1470
        %1535 = vst [vmem:[%s352 + $0x64] sm:$0xf] %v1471
        %1536 = vst [vmem:[%s352 + $0x68] sm:$0xf] %v1472
        %1537 = vst [vmem:[%s352 + $0x6c] sm:$0xf] %v1473
        %1538 = vst [vmem:[%s352 + $0x70] sm:$0xf] %v1474
        %1539 = vst [vmem:[%s352 + $0x74] sm:$0xf] %v1475
        %1540 = vst [vmem:[%s352 + $0x78] sm:$0xf] %v1476
        %1541 = vst [vmem:[%s352 + $0x7c] sm:$0xf] %v1477
        %v1542 = vpack.c.bf16 %v1069, %v1065
        %v1543 = vpack.c.bf16 %v1079, %v1075
        %v1544 = vpack.c.bf16 %v1089, %v1085
        %v1545 = vpack.c.bf16 %v1099, %v1095
        %v1546 = vpack.c.bf16 %v1109, %v1105
        %v1547 = vpack.c.bf16 %v1119, %v1115
        %v1548 = vpack.c.bf16 %v1129, %v1125
        %v1549 = vpack.c.bf16 %v1139, %v1135
        %v1550 = vpack.c.bf16 %v1149, %v1145
        %v1551 = vpack.c.bf16 %v1159, %v1155
        %v1552 = vpack.c.bf16 %v1169, %v1165
        %v1553 = vpack.c.bf16 %v1179, %v1175
        %v1554 = vpack.c.bf16 %v1189, %v1185
        %v1555 = vpack.c.bf16 %v1199, %v1195
        %v1556 = vpack.c.bf16 %v1209, %v1205
        %v1557 = vpack.c.bf16 %v1219, %v1215
        %v1574 = vunpack.c.l.b16 %v1542
        %v1575 = vunpack.c.h.b16 %v1542
        %v1576 = vunpack.c.l.b16 %v1543
        %v1577 = vunpack.c.h.b16 %v1543
        %v1578 = vunpack.c.l.b16 %v1544
        %v1579 = vunpack.c.h.b16 %v1544
        %v1580 = vunpack.c.l.b16 %v1545
        %v1581 = vunpack.c.h.b16 %v1545
        %v1582 = vunpack.c.l.b16 %v1546
        %v1583 = vunpack.c.h.b16 %v1546
        %v1584 = vunpack.c.l.b16 %v1547
        %v1585 = vunpack.c.h.b16 %v1547
        %v1586 = vunpack.c.l.b16 %v1548
        %v1587 = vunpack.c.h.b16 %v1548
        %v1588 = vunpack.c.l.b16 %v1549
        %v1589 = vunpack.c.h.b16 %v1549
        %v1590 = vunpack.c.l.b16 %v1550
        %v1591 = vunpack.c.h.b16 %v1550
        %v1592 = vunpack.c.l.b16 %v1551
        %v1593 = vunpack.c.h.b16 %v1551
        %v1594 = vunpack.c.l.b16 %v1552
        %v1595 = vunpack.c.h.b16 %v1552
        %v1596 = vunpack.c.l.b16 %v1553
        %v1597 = vunpack.c.h.b16 %v1553
        %v1598 = vunpack.c.l.b16 %v1554
        %v1599 = vunpack.c.h.b16 %v1554
        %v1600 = vunpack.c.l.b16 %v1555
        %v1601 = vunpack.c.h.b16 %v1555
        %v1602 = vunpack.c.l.b16 %v1556
        %v1603 = vunpack.c.h.b16 %v1556
        %v1604 = vunpack.c.l.b16 %v1557
        %v1605 = vunpack.c.h.b16 %v1557
        %v1606 = vpack.c.b16 %v1574, %v1574
        %v1607 = vpack.c.b16 %v1575, %v1575
        %v1608 = vpack.c.b16 %v1576, %v1576
        %v1609 = vpack.c.b16 %v1577, %v1577
        %v1610 = vpack.c.b16 %v1578, %v1578
        %v1611 = vpack.c.b16 %v1579, %v1579
        %v1612 = vpack.c.b16 %v1580, %v1580
        %v1613 = vpack.c.b16 %v1581, %v1581
        %v1614 = vpack.c.b16 %v1582, %v1582
        %v1615 = vpack.c.b16 %v1583, %v1583
        %v1616 = vpack.c.b16 %v1584, %v1584
        %v1617 = vpack.c.b16 %v1585, %v1585
        %v1618 = vpack.c.b16 %v1586, %v1586
        %v1619 = vpack.c.b16 %v1587, %v1587
        %v1620 = vpack.c.b16 %v1588, %v1588
        %v1621 = vpack.c.b16 %v1589, %v1589
        %v1622 = vpack.c.b16 %v1590, %v1590
        %v1623 = vpack.c.b16 %v1591, %v1591
        %v1624 = vpack.c.b16 %v1592, %v1592
        %v1625 = vpack.c.b16 %v1593, %v1593
        %v1626 = vpack.c.b16 %v1594, %v1594
        %v1627 = vpack.c.b16 %v1595, %v1595
        %v1628 = vpack.c.b16 %v1596, %v1596
        %v1629 = vpack.c.b16 %v1597, %v1597
        %v1630 = vpack.c.b16 %v1598, %v1598
        %v1631 = vpack.c.b16 %v1599, %v1599
        %v1632 = vpack.c.b16 %v1600, %v1600
        %v1633 = vpack.c.b16 %v1601, %v1601
        %v1634 = vpack.c.b16 %v1602, %v1602
        %v1635 = vpack.c.b16 %v1603, %v1603
        %v1636 = vpack.c.b16 %v1604, %v1604
        %v1637 = vpack.c.b16 %v1605, %v1605
        %1670 = vst [vmem:[%s359] sm:$0xf] %v1606
        %1671 = vst [vmem:[%s359 + $0x4] sm:$0xf] %v1607
        %1672 = vst [vmem:[%s359 + $0x8] sm:$0xf] %v1608
        %1673 = vst [vmem:[%s359 + $0xc] sm:$0xf] %v1609
        %1674 = vst [vmem:[%s359 + $0x10] sm:$0xf] %v1610
        %1675 = vst [vmem:[%s359 + $0x14] sm:$0xf] %v1611
        %1676 = vst [vmem:[%s359 + $0x18] sm:$0xf] %v1612
        %1677 = vst [vmem:[%s359 + $0x1c] sm:$0xf] %v1613
        %1678 = vst [vmem:[%s359 + $0x20] sm:$0xf] %v1614
        %1679 = vst [vmem:[%s359 + $0x24] sm:$0xf] %v1615
        %1680 = vst [vmem:[%s359 + $0x28] sm:$0xf] %v1616
        %1681 = vst [vmem:[%s359 + $0x2c] sm:$0xf] %v1617
        %1682 = vst [vmem:[%s359 + $0x30] sm:$0xf] %v1618
        %1683 = vst [vmem:[%s359 + $0x34] sm:$0xf] %v1619
        %1684 = vst [vmem:[%s359 + $0x38] sm:$0xf] %v1620
        %1685 = vst [vmem:[%s359 + $0x3c] sm:$0xf] %v1621
        %1686 = vst [vmem:[%s359 + $0x40] sm:$0xf] %v1622
        %1687 = vst [vmem:[%s359 + $0x44] sm:$0xf] %v1623
        %1688 = vst [vmem:[%s359 + $0x48] sm:$0xf] %v1624
        %1689 = vst [vmem:[%s359 + $0x4c] sm:$0xf] %v1625
        %1690 = vst [vmem:[%s359 + $0x50] sm:$0xf] %v1626
        %1691 = vst [vmem:[%s359 + $0x54] sm:$0xf] %v1627
        %1692 = vst [vmem:[%s359 + $0x58] sm:$0xf] %v1628
        %1693 = vst [vmem:[%s359 + $0x5c] sm:$0xf] %v1629
        %1694 = vst [vmem:[%s359 + $0x60] sm:$0xf] %v1630
        %1695 = vst [vmem:[%s359 + $0x64] sm:$0xf] %v1631
        %1696 = vst [vmem:[%s359 + $0x68] sm:$0xf] %v1632
        %1697 = vst [vmem:[%s359 + $0x6c] sm:$0xf] %v1633
        %1698 = vst [vmem:[%s359 + $0x70] sm:$0xf] %v1634
        %1699 = vst [vmem:[%s359 + $0x74] sm:$0xf] %v1635
        %1700 = vst [vmem:[%s359 + $0x78] sm:$0xf] %v1636
        %1701 = vst [vmem:[%s359 + $0x7c] sm:$0xf] %v1637
        %v1702 = vpack.c.bf16 %v1259, %v1256
        %v1703 = vpack.c.bf16 %v1267, %v1264
        %v1704 = vpack.c.bf16 %v1275, %v1272
        %v1705 = vpack.c.bf16 %v1283, %v1280
        %v1706 = vpack.c.bf16 %v1291, %v1288
        %v1707 = vpack.c.bf16 %v1299, %v1296
        %v1708 = vpack.c.bf16 %v1307, %v1304
        %v1709 = vpack.c.bf16 %v1315, %v1312
        %v1710 = vpack.c.bf16 %v1323, %v1320
        %v1711 = vpack.c.bf16 %v1331, %v1328
        %v1712 = vpack.c.bf16 %v1339, %v1336
        %v1713 = vpack.c.bf16 %v1347, %v1344
        %v1714 = vpack.c.bf16 %v1355, %v1352
        %v1715 = vpack.c.bf16 %v1363, %v1360
        %v1716 = vpack.c.bf16 %v1371, %v1368
        %v1717 = vpack.c.bf16 %v1379, %v1376
        %v1734 = vunpack.c.l.b16 %v1702
        %v1735 = vunpack.c.h.b16 %v1702
        %v1736 = vunpack.c.l.b16 %v1703
        %v1737 = vunpack.c.h.b16 %v1703
        %v1738 = vunpack.c.l.b16 %v1704
        %v1739 = vunpack.c.h.b16 %v1704
        %v1740 = vunpack.c.l.b16 %v1705
        %v1741 = vunpack.c.h.b16 %v1705
        %v1742 = vunpack.c.l.b16 %v1706
        %v1743 = vunpack.c.h.b16 %v1706
        %v1744 = vunpack.c.l.b16 %v1707
        %v1745 = vunpack.c.h.b16 %v1707
        %v1746 = vunpack.c.l.b16 %v1708
        %v1747 = vunpack.c.h.b16 %v1708
        %v1748 = vunpack.c.l.b16 %v1709
        %v1749 = vunpack.c.h.b16 %v1709
        %v1750 = vunpack.c.l.b16 %v1710
        %v1751 = vunpack.c.h.b16 %v1710
        %v1752 = vunpack.c.l.b16 %v1711
        %v1753 = vunpack.c.h.b16 %v1711
        %v1754 = vunpack.c.l.b16 %v1712
        %v1755 = vunpack.c.h.b16 %v1712
        %v1756 = vunpack.c.l.b16 %v1713
        %v1757 = vunpack.c.h.b16 %v1713
        %v1758 = vunpack.c.l.b16 %v1714
        %v1759 = vunpack.c.h.b16 %v1714
        %v1760 = vunpack.c.l.b16 %v1715
        %v1761 = vunpack.c.h.b16 %v1715
        %v1762 = vunpack.c.l.b16 %v1716
        %v1763 = vunpack.c.h.b16 %v1716
        %v1764 = vunpack.c.l.b16 %v1717
        %v1765 = vunpack.c.h.b16 %v1717
        %v1766 = vpack.c.b16 %v1734, %v1734
        %v1767 = vpack.c.b16 %v1735, %v1735
        %v1768 = vpack.c.b16 %v1736, %v1736
        %v1769 = vpack.c.b16 %v1737, %v1737
        %v1770 = vpack.c.b16 %v1738, %v1738
        %v1771 = vpack.c.b16 %v1739, %v1739
        %v1772 = vpack.c.b16 %v1740, %v1740
        %v1773 = vpack.c.b16 %v1741, %v1741
        %v1774 = vpack.c.b16 %v1742, %v1742
        %v1775 = vpack.c.b16 %v1743, %v1743
        %v1776 = vpack.c.b16 %v1744, %v1744
        %v1777 = vpack.c.b16 %v1745, %v1745
        %v1778 = vpack.c.b16 %v1746, %v1746
        %v1779 = vpack.c.b16 %v1747, %v1747
        %v1780 = vpack.c.b16 %v1748, %v1748
        %v1781 = vpack.c.b16 %v1749, %v1749
        %v1782 = vpack.c.b16 %v1750, %v1750
        %v1783 = vpack.c.b16 %v1751, %v1751
        %v1784 = vpack.c.b16 %v1752, %v1752
        %v1785 = vpack.c.b16 %v1753, %v1753
        %v1786 = vpack.c.b16 %v1754, %v1754
        %v1787 = vpack.c.b16 %v1755, %v1755
        %v1788 = vpack.c.b16 %v1756, %v1756
        %v1789 = vpack.c.b16 %v1757, %v1757
        %v1790 = vpack.c.b16 %v1758, %v1758
        %v1791 = vpack.c.b16 %v1759, %v1759
        %v1792 = vpack.c.b16 %v1760, %v1760
        %v1793 = vpack.c.b16 %v1761, %v1761
        %v1794 = vpack.c.b16 %v1762, %v1762
        %v1795 = vpack.c.b16 %v1763, %v1763
        %v1796 = vpack.c.b16 %v1764, %v1764
        %v1797 = vpack.c.b16 %v1765, %v1765
        %1830 = vst [vmem:[%s366] sm:$0xf] %v1766
        %1831 = vst [vmem:[%s366 + $0x4] sm:$0xf] %v1767
        %1832 = vst [vmem:[%s366 + $0x8] sm:$0xf] %v1768
        %1833 = vst [vmem:[%s366 + $0xc] sm:$0xf] %v1769
        %1834 = vst [vmem:[%s366 + $0x10] sm:$0xf] %v1770
        %1835 = vst [vmem:[%s366 + $0x14] sm:$0xf] %v1771
        %1836 = vst [vmem:[%s366 + $0x18] sm:$0xf] %v1772
        %1837 = vst [vmem:[%s366 + $0x1c] sm:$0xf] %v1773
        %1838 = vst [vmem:[%s366 + $0x20] sm:$0xf] %v1774
        %1839 = vst [vmem:[%s366 + $0x24] sm:$0xf] %v1775
        %1840 = vst [vmem:[%s366 + $0x28] sm:$0xf] %v1776
        %1841 = vst [vmem:[%s366 + $0x2c] sm:$0xf] %v1777
        %1842 = vst [vmem:[%s366 + $0x30] sm:$0xf] %v1778
        %1843 = vst [vmem:[%s366 + $0x34] sm:$0xf] %v1779
        %1844 = vst [vmem:[%s366 + $0x38] sm:$0xf] %v1780
        %1845 = vst [vmem:[%s366 + $0x3c] sm:$0xf] %v1781
        %1846 = vst [vmem:[%s366 + $0x40] sm:$0xf] %v1782
        %1847 = vst [vmem:[%s366 + $0x44] sm:$0xf] %v1783
        %1848 = vst [vmem:[%s366 + $0x48] sm:$0xf] %v1784
        %1849 = vst [vmem:[%s366 + $0x4c] sm:$0xf] %v1785
        %1850 = vst [vmem:[%s366 + $0x50] sm:$0xf] %v1786
        %1851 = vst [vmem:[%s366 + $0x54] sm:$0xf] %v1787
        %1852 = vst [vmem:[%s366 + $0x58] sm:$0xf] %v1788
        %1853 = vst [vmem:[%s366 + $0x5c] sm:$0xf] %v1789
        %1854 = vst [vmem:[%s366 + $0x60] sm:$0xf] %v1790
        %1855 = vst [vmem:[%s366 + $0x64] sm:$0xf] %v1791
        %1856 = vst [vmem:[%s366 + $0x68] sm:$0xf] %v1792
        %1857 = vst [vmem:[%s366 + $0x6c] sm:$0xf] %v1793
        %1858 = vst [vmem:[%s366 + $0x70] sm:$0xf] %v1794
        %1859 = vst [vmem:[%s366 + $0x74] sm:$0xf] %v1795
        %1860 = vst [vmem:[%s366 + $0x78] sm:$0xf] %v1796
        %1861 = vst [vmem:[%s366 + $0x7c] sm:$0xf] %v1797
        %s1862 = sand.u32 %s148, 1
        %s1863 = scalar_lea.sflag [#allocation4], %s1862
        %s1864 = sand.u32 %s148, 1
        %s1865 = smul.addr %s1864, 128
        %s1866 = scalar_lea.vmem [#allocation11], %s1865
        %s1867 = sand.u32 %s30, 1
        %s1868 = scalar_lea.sflag [#allocation13], %s1867
        %s1869 = sand.u32 %s174, 1
        %s1870 = smul.addr %s1869, 128
        %s1871 = scalar_lea.vmem [#allocation12], %s1870
        %s1872 = sand.u32 %s30, 1
        %s1873 = scalar_lea.sflag [#allocation13], %s1872
        %s1874 = sand.u32 %s200, 1
        %s1875 = smul.addr %s1874, 128
        %s1876 = scalar_lea.vmem [#allocation14], %s1875
        // Predicated region
        $region61: #{tpu_custom_call.1} parent=39 // pred_check
          %p1877 = pneg %p158
        $region62: #{tpu_custom_call.1} parent=39 // pred_check_branch
          %1879 = sbr.rel (%p1877) target = $region64
        $region63: #{tpu_custom_call.1} parent=39 // pred_region
          %s1880 = smul.u32 32, %s30
          %s1882 = ssub.s32 2048, 2048
          %1883 = vsyncadd %s1863, %s1882
          %s1884 = smul.addr %s1880, 64
          %s1885 = scalar_lea.hbm %s5, %s1884
          %s1886 = sshll.u32 %s1866, 4
          %s1887 = int_to_ptr.vmem [resolvable:$true] %s1886
          %1892 = dma.vmem_to_hbm [thread:$0]  %s1887, 2048, %s1885, %s1863, 64, 64, 4
        $region64: #{tpu_custom_call.1} parent=39 // pred_fallthru
          _
        // Predicated region
        $region65: #{tpu_custom_call.1} parent=39 // pred_check
          %p1893 = pneg %p184
        $region66: #{tpu_custom_call.1} parent=39 // pred_check_branch
          %1895 = sbr.rel (%p1893) target = $region68
        $region67: #{tpu_custom_call.1} parent=39 // pred_region
          %s1896 = smul.u32 32, %s30
          %s1898 = ssub.s32 2048, 2048
          %1899 = vsyncadd %s1868, %s1898
          %s1900 = smul.addr %s1896, 64
          %s1901 = scalar_lea.hbm %s6, %s1900
          %s1902 = sshll.u32 %s1871, 4
          %s1903 = int_to_ptr.vmem [resolvable:$true] %s1902
          %1908 = dma.vmem_to_hbm [thread:$0]  %s1903, 2048, %s1901, %s1868, 64, 64, 4
        $region68: #{tpu_custom_call.1} parent=39 // pred_fallthru
          _
        // Predicated region
        $region69: #{tpu_custom_call.1} parent=39 // pred_check
          %p1909 = pneg %p210
        $region70: #{tpu_custom_call.1} parent=39 // pred_check_branch
          %1911 = sbr.rel (%p1909) target = $region72
        $region71: #{tpu_custom_call.1} parent=39 // pred_region
          %s1912 = smul.u32 32, %s30
          %s1914 = ssub.s32 2048, 2048
          %1915 = vsyncadd %s1873, %s1914
          %s1916 = smul.addr %s1912, 64
          %s1917 = scalar_lea.hbm %s7, %s1916
          %s1918 = sshll.u32 %s1876, 4
          %s1919 = int_to_ptr.vmem [resolvable:$true] %s1918
          %1924 = dma.vmem_to_hbm [thread:$0]  %s1919, 2048, %s1917, %s1873, 64, 64, 4
        $region72: #{tpu_custom_call.1} parent=39 // pred_fallthru
          _
      $region40: #{tpu_custom_call.1} parent=5 // pred_fallthru
        _
      %p1925 = scmp.le.s32.totalorder 2, %s25
      // Predicated region
      $region73: #{tpu_custom_call.1} parent=5 // pred_check
        %p1926 = pneg %p1925
      $region74: #{tpu_custom_call.1} parent=5 // pred_check_branch
        %1928 = sbr.rel (%p1926) target = $region76
      $region75: #{tpu_custom_call.1} parent=5 // pred_region
        %s1929 = ssub.s32 %s25, 2
        // Predicated region
        $region77: #{tpu_custom_call.1} parent=75 // pred_check
          %p1930 = pneg %p164
        $region78: #{tpu_custom_call.1} parent=75 // pred_check_branch
          %1932 = sbr.rel (%p1930) target = $region80
        $region79: #{tpu_custom_call.1} parent=75 // pred_region
          %s1933 = sand.u32 %s149, 1
          %s1934 = scalar_lea.sflag [#allocation4], %s1933
          %s1935 = sand.u32 %s149, 1
          %s1936 = smul.addr %s1935, 128
          %s1937 = scalar_lea.vmem [#allocation11], %s1936
          %1938 = dma.done %s1934, 2048
        $region80: #{tpu_custom_call.1} parent=75 // pred_fallthru
          _
        // Predicated region
        $region81: #{tpu_custom_call.1} parent=75 // pred_check
          %p1939 = pneg %p190
        $region82: #{tpu_custom_call.1} parent=75 // pred_check_branch
          %1941 = sbr.rel (%p1939) target = $region84
        $region83: #{tpu_custom_call.1} parent=75 // pred_region
          %s1942 = sand.u32 %s31, 1
          %s1943 = scalar_lea.sflag [#allocation13], %s1942
          %s1944 = sand.u32 %s175, 1
          %s1945 = smul.addr %s1944, 128
          %s1946 = scalar_lea.vmem [#allocation12], %s1945
          %1947 = dma.done %s1943, 2048
        $region84: #{tpu_custom_call.1} parent=75 // pred_fallthru
          _
        // Predicated region
        $region85: #{tpu_custom_call.1} parent=75 // pred_check
          %p1948 = pneg %p216
        $region86: #{tpu_custom_call.1} parent=75 // pred_check_branch
          %1950 = sbr.rel (%p1948) target = $region88
        $region87: #{tpu_custom_call.1} parent=75 // pred_region
          %s1951 = sand.u32 %s31, 1
          %s1952 = scalar_lea.sflag [#allocation13], %s1951
          %s1953 = sand.u32 %s201, 1
          %s1954 = smul.addr %s1953, 128
          %s1955 = scalar_lea.vmem [#allocation14], %s1954
          %1956 = dma.done %s1952, 2048
        $region88: #{tpu_custom_call.1} parent=75 // pred_fallthru
          _
      $region76: #{tpu_custom_call.1} parent=5 // pred_fallthru
        _
    $region6: #{tpu_custom_call.1} parent=1 // loop_footer
      %s29 = sadd.s32 1, %s25
    $region7: #{tpu_custom_call.1} parent=1 // loop_footer_branch
      %24 = sbr.rel target = $region3
    $region8: #{tpu_custom_call.1} parent=1 // loop_exit
      _
    %1957 = vsyncpa [#allocation3], 1
    %s1958 = scalar_lea.sflag [#allocation3], 1
    %1959 = vsyncpa %s1958, 1
    %1960 = vsyncpa [#allocation6], 1
    %1961 = vsyncpa [#allocation9], 1
    %1962 = vsyncpa [#allocation4], 1
    %s1963 = scalar_lea.sflag [#allocation4], 1
    %1964 = vsyncpa %s1963, 1
    %1965 = vsyncpa [#allocation13], 1
    %s1966 = scalar_lea.sflag [#allocation13], 1
    %1967 = vsyncpa %s1966, 1

</llo_original>
